<compile_context>
chip_gen: v7x
topology: tpu7x:2x2x1
jax: 0.10.0
libtpu: 0.0.40
codegen_flags: <defaults>
</compile_context>

<pallas_src>
import functools

import jax
import jax.numpy as jnp
from jax.experimental import pallas as pl
from jax.experimental.pallas import tpu as pltpu

BN_EPS = 1e-5


# ----------------------------------------------------------------------------
# Pallas kernel: matmul(+bias) -> BatchNorm(train) -> optional ReLU
# ----------------------------------------------------------------------------
def _conv_bn_kernel(a_ref, w_ref, p_ref, o_ref, *, relu_out):
    # a: (M, K) bf16, w: (K, Nc) bf16, p: (3, Nc) f32 rows = [bias, gamma, beta]
    z = jnp.dot(a_ref[...], w_ref[...], preferred_element_type=jnp.float32)
    p = p_ref[...]
    z = z + p[0:1, :]                           # conv bias (per output channel)
    inv_m = 1.0 / z.shape[0]
    mu = jnp.sum(z, axis=0, keepdims=True) * inv_m
    var = jnp.sum(z * z, axis=0, keepdims=True) * inv_m - mu * mu  # biased var
    y = (z - mu) * jax.lax.rsqrt(var + BN_EPS) * p[1:2, :] + p[2:3, :]
    if relu_out:
        y = jnp.maximum(y, 0.0)
    o_ref[...] = y


def conv_bn(a, w_mat, params, *, relu_out):
    """a: (M, K) f32 im2col matrix, w_mat: (K, Nc), params: (3, Nc)."""
    M, K = a.shape
    Nc = w_mat.shape[1]
    a = a.astype(jnp.bfloat16)
    w_mat = w_mat.astype(jnp.bfloat16)
    kernel = functools.partial(_conv_bn_kernel, relu_out=relu_out)
    flops = 2 * M * K * Nc
    bytes_accessed = (a.size + w_mat.size) * 2 + (params.size + M * Nc) * 4
    return pl.pallas_call(
        kernel,
        out_shape=jax.ShapeDtypeStruct((M, Nc), jnp.float32),
        grid=(1,),
        in_specs=[
            pl.BlockSpec((M, K), lambda i: (0, 0)),
            pl.BlockSpec((K, Nc), lambda i: (0, 0)),
            pl.BlockSpec((3, Nc), lambda i: (0, 0)),
        ],
        out_specs=pl.BlockSpec((M, Nc), lambda i: (0, 0)),
        compiler_params=pltpu.CompilerParams(
            dimension_semantics=("arbitrary",)),
        cost_estimate=pl.CostEstimate(flops=flops, transcendentals=Nc,
                                      bytes_accessed=bytes_accessed),
    )(a, w_mat, params)


# ----------------------------------------------------------------------------
# Pallas kernel: whole residual block fused in one call
#   a (= im2col(relu(x))) @ w3 -> BN -> ReLU -> @ w4 -> BN -> + x -> (ReLU?)
#   The intermediate h stays in registers / VMEM (never written to HBM).
# ----------------------------------------------------------------------------
def _residual_block_kernel(a_ref, w3_ref, p3_ref, w4_ref, p4_ref, res_ref,
                           o_ref, *, relu_out):
    inv_m = 1.0 / a_ref.shape[0]

    # conv3x3 (no bias) + BN + ReLU
    z = jnp.dot(a_ref[...], w3_ref[...], preferred_element_type=jnp.float32)
    p3 = p3_ref[...]
    mu = jnp.sum(z, axis=0, keepdims=True) * inv_m
    var = jnp.sum(z * z, axis=0, keepdims=True) * inv_m - mu * mu
    h = (z - mu) * jax.lax.rsqrt(var + BN_EPS) * p3[0:1, :] + p3[1:2, :]
    h = jnp.maximum(h, 0.0)

    # conv1x1 (no bias) + BN
    z2 = jnp.dot(h.astype(w4_ref.dtype), w4_ref[...],
                 preferred_element_type=jnp.float32)
    p4 = p4_ref[...]
    mu2 = jnp.sum(z2, axis=0, keepdims=True) * inv_m
    var2 = jnp.sum(z2 * z2, axis=0, keepdims=True) * inv_m - mu2 * mu2
    y = (z2 - mu2) * jax.lax.rsqrt(var2 + BN_EPS) * p4[0:1, :] + p4[1:2, :]

    # skip connection (+ final stack ReLU fused into the last layer)
    y = y + res_ref[...]
    if relu_out:
        y = jnp.maximum(y, 0.0)
    o_ref[...] = y


def residual_block(a, w3_mat, p3, w4_mat, p4, res, *, relu_out):
    M, K = a.shape
    Crh = w3_mat.shape[1]
    Ch = w4_mat.shape[1]
    a = a.astype(jnp.bfloat16)
    w3_mat = w3_mat.astype(jnp.bfloat16)
    w4_mat = w4_mat.astype(jnp.bfloat16)
    kernel = functools.partial(_residual_block_kernel, relu_out=relu_out)
    flops = 2 * M * K * Crh + 2 * M * Crh * Ch
    bytes_accessed = ((a.size + w3_mat.size + w4_mat.size) * 2
                      + (p3.size + p4.size + res.size + M * Ch) * 4)
    return pl.pallas_call(
        kernel,
        out_shape=jax.ShapeDtypeStruct((M, Ch), jnp.float32),
        grid=(1,),
        in_specs=[
            pl.BlockSpec((M, K), lambda i: (0, 0)),
            pl.BlockSpec((K, Crh), lambda i: (0, 0)),
            pl.BlockSpec((2, Crh), lambda i: (0, 0)),
            pl.BlockSpec((Crh, Ch), lambda i: (0, 0)),
            pl.BlockSpec((2, Ch), lambda i: (0, 0)),
            pl.BlockSpec((M, Ch), lambda i: (0, 0)),
        ],
        out_specs=pl.BlockSpec((M, Ch), lambda i: (0, 0)),
        compiler_params=pltpu.CompilerParams(
            dimension_semantics=("arbitrary",)),
        cost_estimate=pl.CostEstimate(flops=flops, transcendentals=Crh + Ch,
                                      bytes_accessed=bytes_accessed),
    )(a, w3_mat, p3, w4_mat, p4, res)


# ----------------------------------------------------------------------------
# Glue: im2col patch extraction and weight layout conversion (plain JAX/XLA)
# ----------------------------------------------------------------------------
def im2col(x, k, s, p):
    """x: NHWC -> (N*Ho*Wo, k*k*C), column order (kh, kw, c)."""
    N, H, W, C = x.shape
    xp = jnp.pad(x, ((0, 0), (p, p), (p, p), (0, 0)))
    Ho = (H + 2 * p - k) // s + 1
    Wo = (W + 2 * p - k) // s + 1
    cols = []
    for kh in range(k):
        for kw in range(k):
            cols.append(xp[:, kh:kh + (Ho - 1) * s + 1:s,
                           kw:kw + (Wo - 1) * s + 1:s, :])
    patches = jnp.stack(cols, axis=3)                 # (N, Ho, Wo, k*k, C)
    return patches.reshape(N * Ho * Wo, k * k * C), (N, Ho, Wo)


def to_wmat(w_pt):
    """PyTorch (Cout, Cin, kh, kw) -> (kh*kw*Cin, Cout), matching im2col order."""
    co, ci, kh, kw = w_pt.shape
    return jnp.transpose(w_pt, (2, 3, 1, 0)).reshape(kh * kw * ci, co)


# ----------------------------------------------------------------------------
# Encoder forward
# ----------------------------------------------------------------------------
def encoder_forward(x_nchw, conv1_p, conv2_p, res_params):
    x = jnp.transpose(x_nchw, (0, 2, 3, 1)).astype(jnp.float32)   # NHWC

    # conv_1: Conv2d(k=4, s=2, p=1, bias) + BN + ReLU
    w1, b1, g1, be1 = conv1_p
    a, (n, h, w_) = im2col(x, 4, 2, 1)
    p1 = jnp.stack([b1, g1, be1], axis=0)             # (3, C) packed params
    y = conv_bn(a, to_wmat(w1), p1, relu_out=True)
    x = y.reshape(n, h, w_, -1)

    # conv_2: Conv2d(k=4, s=2, p=1, bias) + BN (no ReLU)
    w2, b2, g2, be2 = conv2_p
    a, (n, h, w_) = im2col(x, 4, 2, 1)
    p2 = jnp.stack([b2, g2, be2], axis=0)
    y = conv_bn(a, to_wmat(w2), p2, relu_out=False)
    x = y.reshape(n, h, w_, -1)

    # residual stack: each block is a single fused pallas_call
    num_layers = len(res_params)
    for li, (w3, g3, be3, w4, g4, be4) in enumerate(res_params):
        x_flat = x.reshape(n * h * w_, -1)
        xr = jnp.maximum(x, 0.0)        # input ReLU applied once, pre-im2col
        a, _ = im2col(xr, 3, 1, 1)
        p3 = jnp.stack([g3, be3], axis=0)
        p4 = jnp.stack([g4, be4], axis=0)
        is_last = (li == num_layers - 1)   # final stack ReLU fused here
        y = residual_block(a, to_wmat(w3), p3, to_wmat(w4), p4, x_flat,
                           relu_out=is_last)
        x = y.reshape(n, h, w_, -1)

    return jnp.transpose(x, (0, 3, 1, 2))             # back to NCHW


# ----------------------------------------------------------------------------
# Driver
# ----------------------------------------------------------------------------
if __name__ == "__main__":
    in_channels, num_hiddens = 4, 32
    num_residual_layers, num_residual_hiddens = 2, 16
    B, Hs, Ws = 2, 16, 16

    key = jax.random.PRNGKey(0)
    keys = iter(jax.random.split(key, 64))

    def nrm(shape):
        return 0.1 * jax.random.normal(next(keys), shape, dtype=jnp.float32)

    nh2 = num_hiddens // 2
    # conv_1 / conv_2 params (PyTorch layouts); BN gamma/beta defaults (1, 0)
    conv1_p = (nrm((nh2, in_channels, 4, 4)), nrm((nh2,)),
               jnp.ones((nh2,), jnp.float32), jnp.zeros((nh2,), jnp.float32))
    conv2_p = (nrm((num_hiddens, nh2, 4, 4)), nrm((num_hiddens,)),
               jnp.ones((num_hiddens,), jnp.float32),
               jnp.zeros((num_hiddens,), jnp.float32))
    res_params = []
    for _ in range(num_residual_layers):
        res_params.append((
            nrm((num_residual_hiddens, num_hiddens, 3, 3)),
            jnp.ones((num_residual_hiddens,), jnp.float32),
            jnp.zeros((num_residual_hiddens,), jnp.float32),
            nrm((num_hiddens, num_residual_hiddens, 1, 1)),
            jnp.ones((num_hiddens,), jnp.float32),
            jnp.zeros((num_hiddens,), jnp.float32),
        ))

    x = jax.random.normal(next(keys), (B, in_channels, Hs, Ws),
                          dtype=jnp.float32)

    encoder_fn = jax.jit(encoder_forward)
    out = encoder_fn(x, conv1_p, conv2_p, res_params)
    out = jax.block_until_ready(out)
    assert out.shape == (B, num_hiddens, Hs // 4, Ws // 4), out.shape
    print("KERNEL_OK")
</pallas_src>

<mosaic_0001>
module attributes {stable_mosaic.version = 11 : i64} {
  func.func @_conv_bn_kernel(%arg0: i32, %arg1: memref<128x64xbf16, #tpu.memory_space<vmem>>, %arg2: memref<64x16xbf16, #tpu.memory_space<vmem>>, %arg3: memref<3x16xf32, #tpu.memory_space<vmem>>, %arg4: memref<128x16xf32, #tpu.memory_space<vmem>>) attributes {dimension_semantics = [#tpu.dimension_semantics<arbitrary>], iteration_bounds = array<i64: 1>, scalar_prefetch = 0 : i64, scratch_operands = 0 : i64, tpu.core_type = #tpu.core_type<tc>, window_params = [{pipeline_mode = #tpu.pipeline_mode<synchronous>, transform_indices = @transform_0, window_bounds = array<i64: 128, 64>}, {pipeline_mode = #tpu.pipeline_mode<synchronous>, transform_indices = @transform_1, window_bounds = array<i64: 64, 16>}, {pipeline_mode = #tpu.pipeline_mode<synchronous>, transform_indices = @transform_2, window_bounds = array<i64: 3, 16>}, {pipeline_mode = #tpu.pipeline_mode<synchronous>, transform_indices = @transform_3, window_bounds = array<i64: 128, 16>}]} {
    %c0 = arith.constant 0 : index
    %c0_0 = arith.constant 0 : index
    %0 = vector.load %arg1[%c0, %c0_0] : memref<128x64xbf16, #tpu.memory_space<vmem>>, vector<128x64xbf16>
    %c0_1 = arith.constant 0 : index
    %c0_2 = arith.constant 0 : index
    %1 = vector.load %arg2[%c0_1, %c0_2] : memref<64x16xbf16, #tpu.memory_space<vmem>>, vector<64x16xbf16>
    %cst = arith.constant dense<0.000000e+00> : vector<128x16xf32>
    %2 = tpu.matmul %0, %1, %cst {dimension_numbers = #tpu.dot_dimension_numbers<[1], [0], [0], [1], [0, 0, 1, 1], [], []>} : vector<128x64xbf16>, vector<64x16xbf16>, vector<128x16xf32> -> vector<128x16xf32>
    %c0_3 = arith.constant 0 : index
    %c0_4 = arith.constant 0 : index
    %3 = vector.load %arg3[%c0_3, %c0_4] : memref<3x16xf32, #tpu.memory_space<vmem>>, vector<3x16xf32>
    %4 = vector.extract_strided_slice %3 {offsets = [0, 0], sizes = [1, 16], strides = [1, 1]} : vector<3x16xf32> to vector<1x16xf32>
    %5 = vector.broadcast %4 : vector<1x16xf32> to vector<128x16xf32>
    %6 = arith.addf %2, %5 : vector<128x16xf32>
    %cst_5 = arith.constant dense<0.000000e+00> : vector<16xf32>
    %7 = vector.multi_reduction <add>, %6, %cst_5 [0] : vector<128x16xf32> to vector<16xf32>
    %8 = vector.shape_cast %7 : vector<16xf32> to vector<1x16xf32>
    %cst_6 = arith.constant 7.812500e-03 : f32
    %9 = vector.broadcast %cst_6 : f32 to vector<1x16xf32>
    %10 = arith.mulf %8, %9 : vector<1x16xf32>
    %11 = arith.mulf %6, %6 : vector<128x16xf32>
    %cst_7 = arith.constant dense<0.000000e+00> : vector<16xf32>
    %12 = vector.multi_reduction <add>, %11, %cst_7 [0] : vector<128x16xf32> to vector<16xf32>
    %13 = vector.shape_cast %12 : vector<16xf32> to vector<1x16xf32>
    %cst_8 = arith.constant 7.812500e-03 : f32
    %14 = vector.broadcast %cst_8 : f32 to vector<1x16xf32>
    %15 = arith.mulf %13, %14 : vector<1x16xf32>
    %16 = arith.mulf %10, %10 : vector<1x16xf32>
    %17 = arith.subf %15, %16 : vector<1x16xf32>
    %18 = vector.broadcast %10 : vector<1x16xf32> to vector<128x16xf32>
    %19 = arith.subf %6, %18 : vector<128x16xf32>
    %cst_9 = arith.constant 9.99999974E-6 : f32
    %20 = vector.broadcast %cst_9 : f32 to vector<1x16xf32>
    %21 = arith.addf %17, %20 : vector<1x16xf32>
    %22 = math.rsqrt %21 : vector<1x16xf32>
    %23 = vector.broadcast %22 : vector<1x16xf32> to vector<128x16xf32>
    %24 = arith.mulf %19, %23 : vector<128x16xf32>
    %25 = vector.extract_strided_slice %3 {offsets = [1, 0], sizes = [1, 16], strides = [1, 1]} : vector<3x16xf32> to vector<1x16xf32>
    %26 = vector.broadcast %25 : vector<1x16xf32> to vector<128x16xf32>
    %27 = arith.mulf %24, %26 : vector<128x16xf32>
    %28 = vector.extract_strided_slice %3 {offsets = [2, 0], sizes = [1, 16], strides = [1, 1]} : vector<3x16xf32> to vector<1x16xf32>
    %29 = vector.broadcast %28 : vector<1x16xf32> to vector<128x16xf32>
    %30 = arith.addf %27, %29 : vector<128x16xf32>
    %cst_10 = arith.constant 0.000000e+00 : f32
    %31 = vector.broadcast %cst_10 : f32 to vector<128x16xf32>
    %32 = arith.maximumf %30, %31 : vector<128x16xf32>
    %c0_11 = arith.constant 0 : index
    %c0_12 = arith.constant 0 : index
    %33 = vector.load %arg4[%c0_11, %c0_12] : memref<128x16xf32, #tpu.memory_space<vmem>>, vector<128x16xf32>
    tpu.vector_store %arg4[%c0_11, %c0_12], %32 {strides = array<i32>} : memref<128x16xf32, #tpu.memory_space<vmem>>, vector<128x16xf32>,
    return
  }
  func.func @transform_0(%arg0: i32) -> (i32, i32) {
    %c0_i32 = arith.constant 0 : i32
    %c0_i32_0 = arith.constant 0 : i32
    %c0_i32_1 = arith.constant 0 : i32
    return %c0_i32, %c0_i32_0 : i32, i32
  }
  func.func @transform_1(%arg0: i32) -> (i32, i32) {
    %c0_i32 = arith.constant 0 : i32
    %c0_i32_0 = arith.constant 0 : i32
    %c0_i32_1 = arith.constant 0 : i32
    return %c0_i32, %c0_i32_0 : i32, i32
  }
  func.func @transform_2(%arg0: i32) -> (i32, i32) {
    %c0_i32 = arith.constant 0 : i32
    %c0_i32_0 = arith.constant 0 : i32
    %c0_i32_1 = arith.constant 0 : i32
    return %c0_i32, %c0_i32_0 : i32, i32
  }
  func.func @transform_3(%arg0: i32) -> (i32, i32) {
    %c0_i32 = arith.constant 0 : i32
    %c0_i32_0 = arith.constant 0 : i32
    %c0_i32_1 = arith.constant 0 : i32
    return %c0_i32, %c0_i32_0 : i32, i32
  }
}

module attributes {stable_mosaic.version = 11 : i64} {
  func.func @_conv_bn_kernel(%arg0: i32, %arg1: memref<32x256xbf16, #tpu.memory_space<vmem>>, %arg2: memref<256x32xbf16, #tpu.memory_space<vmem>>, %arg3: memref<3x32xf32, #tpu.memory_space<vmem>>, %arg4: memref<32x32xf32, #tpu.memory_space<vmem>>) attributes {dimension_semantics = [#tpu.dimension_semantics<arbitrary>], iteration_bounds = array<i64: 1>, scalar_prefetch = 0 : i64, scratch_operands = 0 : i64, tpu.core_type = #tpu.core_type<tc>, window_params = [{pipeline_mode = #tpu.pipeline_mode<synchronous>, transform_indices = @transform_0, window_bounds = array<i64: 32, 256>}, {pipeline_mode = #tpu.pipeline_mode<synchronous>, transform_indices = @transform_1, window_bounds = array<i64: 256, 32>}, {pipeline_mode = #tpu.pipeline_mode<synchronous>, transform_indices = @transform_2, window_bounds = array<i64: 3, 32>}, {pipeline_mode = #tpu.pipeline_mode<synchronous>, transform_indices = @transform_3, window_bounds = array<i64: 32, 32>}]} {
    %c0 = arith.constant 0 : index
    %c0_0 = arith.constant 0 : index
    %0 = vector.load %arg1[%c0, %c0_0] : memref<32x256xbf16, #tpu.memory_space<vmem>>, vector<32x256xbf16>
    %c0_1 = arith.constant 0 : index
    %c0_2 = arith.constant 0 : index
    %1 = vector.load %arg2[%c0_1, %c0_2] : memref<256x32xbf16, #tpu.memory_space<vmem>>, vector<256x32xbf16>
    %cst = arith.constant dense<0.000000e+00> : vector<32x32xf32>
    %2 = tpu.matmul %0, %1, %cst {dimension_numbers = #tpu.dot_dimension_numbers<[1], [0], [0], [1], [0, 0, 1, 1], [], []>} : vector<32x256xbf16>, vector<256x32xbf16>, vector<32x32xf32> -> vector<32x32xf32>
    %c0_3 = arith.constant 0 : index
    %c0_4 = arith.constant 0 : index
    %3 = vector.load %arg3[%c0_3, %c0_4] : memref<3x32xf32, #tpu.memory_space<vmem>>, vector<3x32xf32>
    %4 = vector.extract_strided_slice %3 {offsets = [0, 0], sizes = [1, 32], strides = [1, 1]} : vector<3x32xf32> to vector<1x32xf32>
    %5 = vector.broadcast %4 : vector<1x32xf32> to vector<32x32xf32>
    %6 = arith.addf %2, %5 : vector<32x32xf32>
    %cst_5 = arith.constant dense<0.000000e+00> : vector<32xf32>
    %7 = vector.multi_reduction <add>, %6, %cst_5 [0] : vector<32x32xf32> to vector<32xf32>
    %8 = vector.shape_cast %7 : vector<32xf32> to vector<1x32xf32>
    %cst_6 = arith.constant 3.125000e-02 : f32
    %9 = vector.broadcast %cst_6 : f32 to vector<1x32xf32>
    %10 = arith.mulf %8, %9 : vector<1x32xf32>
    %11 = arith.mulf %6, %6 : vector<32x32xf32>
    %cst_7 = arith.constant dense<0.000000e+00> : vector<32xf32>
    %12 = vector.multi_reduction <add>, %11, %cst_7 [0] : vector<32x32xf32> to vector<32xf32>
    %13 = vector.shape_cast %12 : vector<32xf32> to vector<1x32xf32>
    %cst_8 = arith.constant 3.125000e-02 : f32
    %14 = vector.broadcast %cst_8 : f32 to vector<1x32xf32>
    %15 = arith.mulf %13, %14 : vector<1x32xf32>
    %16 = arith.mulf %10, %10 : vector<1x32xf32>
    %17 = arith.subf %15, %16 : vector<1x32xf32>
    %18 = vector.broadcast %10 : vector<1x32xf32> to vector<32x32xf32>
    %19 = arith.subf %6, %18 : vector<32x32xf32>
    %cst_9 = arith.constant 9.99999974E-6 : f32
    %20 = vector.broadcast %cst_9 : f32 to vector<1x32xf32>
    %21 = arith.addf %17, %20 : vector<1x32xf32>
    %22 = math.rsqrt %21 : vector<1x32xf32>
    %23 = vector.broadcast %22 : vector<1x32xf32> to vector<32x32xf32>
    %24 = arith.mulf %19, %23 : vector<32x32xf32>
    %25 = vector.extract_strided_slice %3 {offsets = [1, 0], sizes = [1, 32], strides = [1, 1]} : vector<3x32xf32> to vector<1x32xf32>
    %26 = vector.broadcast %25 : vector<1x32xf32> to vector<32x32xf32>
    %27 = arith.mulf %24, %26 : vector<32x32xf32>
    %28 = vector.extract_strided_slice %3 {offsets = [2, 0], sizes = [1, 32], strides = [1, 1]} : vector<3x32xf32> to vector<1x32xf32>
    %29 = vector.broadcast %28 : vector<1x32xf32> to vector<32x32xf32>
    %30 = arith.addf %27, %29 : vector<32x32xf32>
    %c0_10 = arith.constant 0 : index
    %c0_11 = arith.constant 0 : index
    %31 = vector.load %arg4[%c0_10, %c0_11] : memref<32x32xf32, #tpu.memory_space<vmem>>, vector<32x32xf32>
    tpu.vector_store %arg4[%c0_10, %c0_11], %30 {strides = array<i32>} : memref<32x32xf32, #tpu.memory_space<vmem>>, vector<32x32xf32>,
    return
  }
  func.func @transform_0(%arg0: i32) -> (i32, i32) {
    %c0_i32 = arith.constant 0 : i32
    %c0_i32_0 = arith.constant 0 : i32
    %c0_i32_1 = arith.constant 0 : i32
    return %c0_i32, %c0_i32_0 : i32, i32
  }
  func.func @transform_1(%arg0: i32) -> (i32, i32) {
    %c0_i32 = arith.constant 0 : i32
    %c0_i32_0 = arith.constant 0 : i32
    %c0_i32_1 = arith.constant 0 : i32
    return %c0_i32, %c0_i32_0 : i32, i32
  }
  func.func @transform_2(%arg0: i32) -> (i32, i32) {
    %c0_i32 = arith.constant 0 : i32
    %c0_i32_0 = arith.constant 0 : i32
    %c0_i32_1 = arith.constant 0 : i32
    return %c0_i32, %c0_i32_0 : i32, i32
  }
  func.func @transform_3(%arg0: i32) -> (i32, i32) {
    %c0_i32 = arith.constant 0 : i32
    %c0_i32_0 = arith.constant 0 : i32
    %c0_i32_1 = arith.constant 0 : i32
    return %c0_i32, %c0_i32_0 : i32, i32
  }
}

module attributes {stable_mosaic.version = 11 : i64} {
  func.func @_residual_block_kernel(%arg0: i32, %arg1: memref<32x288xbf16, #tpu.memory_space<vmem>>, %arg2: memref<288x16xbf16, #tpu.memory_space<vmem>>, %arg3: memref<2x16xf32, #tpu.memory_space<vmem>>, %arg4: memref<16x32xbf16, #tpu.memory_space<vmem>>, %arg5: memref<2x32xf32, #tpu.memory_space<vmem>>, %arg6: memref<32x32xf32, #tpu.memory_space<vmem>>, %arg7: memref<32x32xf32, #tpu.memory_space<vmem>>) attributes {dimension_semantics = [#tpu.dimension_semantics<arbitrary>], iteration_bounds = array<i64: 1>, scalar_prefetch = 0 : i64, scratch_operands = 0 : i64, tpu.core_type = #tpu.core_type<tc>, window_params = [{pipeline_mode = #tpu.pipeline_mode<synchronous>, transform_indices = @transform_0, window_bounds = array<i64: 32, 288>}, {pipeline_mode = #tpu.pipeline_mode<synchronous>, transform_indices = @transform_1, window_bounds = array<i64: 288, 16>}, {pipeline_mode = #tpu.pipeline_mode<synchronous>, transform_indices = @transform_2, window_bounds = array<i64: 2, 16>}, {pipeline_mode = #tpu.pipeline_mode<synchronous>, transform_indices = @transform_3, window_bounds = array<i64: 16, 32>}, {pipeline_mode = #tpu.pipeline_mode<synchronous>, transform_indices = @transform_4, window_bounds = array<i64: 2, 32>}, {pipeline_mode = #tpu.pipeline_mode<synchronous>, transform_indices = @transform_5, window_bounds = array<i64: 32, 32>}, {pipeline_mode = #tpu.pipeline_mode<synchronous>, transform_indices = @transform_6, window_bounds = array<i64: 32, 32>}]} {
    %c0 = arith.constant 0 : index
    %c0_0 = arith.constant 0 : index
    %0 = vector.load %arg1[%c0, %c0_0] : memref<32x288xbf16, #tpu.memory_space<vmem>>, vector<32x288xbf16>
    %c0_1 = arith.constant 0 : index
    %c0_2 = arith.constant 0 : index
    %1 = vector.load %arg2[%c0_1, %c0_2] : memref<288x16xbf16, #tpu.memory_space<vmem>>, vector<288x16xbf16>
    %cst = arith.constant dense<0.000000e+00> : vector<32x16xf32>
    %2 = tpu.matmul %0, %1, %cst {dimension_numbers = #tpu.dot_dimension_numbers<[1], [0], [0], [1], [0, 0, 1, 1], [], []>} : vector<32x288xbf16>, vector<288x16xbf16>, vector<32x16xf32> -> vector<32x16xf32>
    %c0_3 = arith.constant 0 : index
    %c0_4 = arith.constant 0 : index
    %3 = vector.load %arg3[%c0_3, %c0_4] : memref<2x16xf32, #tpu.memory_space<vmem>>, vector<2x16xf32>
    %cst_5 = arith.constant dense<0.000000e+00> : vector<16xf32>
    %4 = vector.multi_reduction <add>, %2, %cst_5 [0] : vector<32x16xf32> to vector<16xf32>
    %5 = vector.shape_cast %4 : vector<16xf32> to vector<1x16xf32>
    %cst_6 = arith.constant 3.125000e-02 : f32
    %6 = vector.broadcast %cst_6 : f32 to vector<1x16xf32>
    %7 = arith.mulf %5, %6 : vector<1x16xf32>
    %8 = arith.mulf %2, %2 : vector<32x16xf32>
    %cst_7 = arith.constant dense<0.000000e+00> : vector<16xf32>
    %9 = vector.multi_reduction <add>, %8, %cst_7 [0] : vector<32x16xf32> to vector<16xf32>
    %10 = vector.shape_cast %9 : vector<16xf32> to vector<1x16xf32>
    %cst_8 = arith.constant 3.125000e-02 : f32
    %11 = vector.broadcast %cst_8 : f32 to vector<1x16xf32>
    %12 = arith.mulf %10, %11 : vector<1x16xf32>
    %13 = arith.mulf %7, %7 : vector<1x16xf32>
    %14 = arith.subf %12, %13 : vector<1x16xf32>
    %15 = vector.broadcast %7 : vector<1x16xf32> to vector<32x16xf32>
    %16 = arith.subf %2, %15 : vector<32x16xf32>
    %cst_9 = arith.constant 9.99999974E-6 : f32
    %17 = vector.broadcast %cst_9 : f32 to vector<1x16xf32>
    %18 = arith.addf %14, %17 : vector<1x16xf32>
    %19 = math.rsqrt %18 : vector<1x16xf32>
    %20 = vector.broadcast %19 : vector<1x16xf32> to vector<32x16xf32>
    %21 = arith.mulf %16, %20 : vector<32x16xf32>
    %22 = vector.extract_strided_slice %3 {offsets = [0, 0], sizes = [1, 16], strides = [1, 1]} : vector<2x16xf32> to vector<1x16xf32>
    %23 = vector.broadcast %22 : vector<1x16xf32> to vector<32x16xf32>
    %24 = arith.mulf %21, %23 : vector<32x16xf32>
    %25 = vector.extract_strided_slice %3 {offsets = [1, 0], sizes = [1, 16], strides = [1, 1]} : vector<2x16xf32> to vector<1x16xf32>
    %26 = vector.broadcast %25 : vector<1x16xf32> to vector<32x16xf32>
    %27 = arith.addf %24, %26 : vector<32x16xf32>
    %cst_10 = arith.constant 0.000000e+00 : f32
    %28 = vector.broadcast %cst_10 : f32 to vector<32x16xf32>
    %29 = arith.maximumf %27, %28 : vector<32x16xf32>
    %30 = arith.truncf %29 : vector<32x16xf32> to vector<32x16xbf16>
    %c0_11 = arith.constant 0 : index
    %c0_12 = arith.constant 0 : index
    %31 = vector.load %arg4[%c0_11, %c0_12] : memref<16x32xbf16, #tpu.memory_space<vmem>>, vector<16x32xbf16>
    %cst_13 = arith.constant dense<0.000000e+00> : vector<32x32xf32>
    %32 = tpu.matmul %30, %31, %cst_13 {dimension_numbers = #tpu.dot_dimension_numbers<[1], [0], [0], [1], [0, 0, 1, 1], [], []>} : vector<32x16xbf16>, vector<16x32xbf16>, vector<32x32xf32> -> vector<32x32xf32>
    %c0_14 = arith.constant 0 : index
    %c0_15 = arith.constant 0 : index
    %33 = vector.load %arg5[%c0_14, %c0_15] : memref<2x32xf32, #tpu.memory_space<vmem>>, vector<2x32xf32>
    %cst_16 = arith.constant dense<0.000000e+00> : vector<32xf32>
    %34 = vector.multi_reduction <add>, %32, %cst_16 [0] : vector<32x32xf32> to vector<32xf32>
    %35 = vector.shape_cast %34 : vector<32xf32> to vector<1x32xf32>
    %cst_17 = arith.constant 3.125000e-02 : f32
    %36 = vector.broadcast %cst_17 : f32 to vector<1x32xf32>
    %37 = arith.mulf %35, %36 : vector<1x32xf32>
    %38 = arith.mulf %32, %32 : vector<32x32xf32>
    %cst_18 = arith.constant dense<0.000000e+00> : vector<32xf32>
    %39 = vector.multi_reduction <add>, %38, %cst_18 [0] : vector<32x32xf32> to vector<32xf32>
    %40 = vector.shape_cast %39 : vector<32xf32> to vector<1x32xf32>
    %cst_19 = arith.constant 3.125000e-02 : f32
    %41 = vector.broadcast %cst_19 : f32 to vector<1x32xf32>
    %42 = arith.mulf %40, %41 : vector<1x32xf32>
    %43 = arith.mulf %37, %37 : vector<1x32xf32>
    %44 = arith.subf %42, %43 : vector<1x32xf32>
    %45 = vector.broadcast %37 : vector<1x32xf32> to vector<32x32xf32>
    %46 = arith.subf %32, %45 : vector<32x32xf32>
    %cst_20 = arith.constant 9.99999974E-6 : f32
    %47 = vector.broadcast %cst_20 : f32 to vector<1x32xf32>
    %48 = arith.addf %44, %47 : vector<1x32xf32>
    %49 = math.rsqrt %48 : vector<1x32xf32>
    %50 = vector.broadcast %49 : vector<1x32xf32> to vector<32x32xf32>
    %51 = arith.mulf %46, %50 : vector<32x32xf32>
    %52 = vector.extract_strided_slice %33 {offsets = [0, 0], sizes = [1, 32], strides = [1, 1]} : vector<2x32xf32> to vector<1x32xf32>
    %53 = vector.broadcast %52 : vector<1x32xf32> to vector<32x32xf32>
    %54 = arith.mulf %51, %53 : vector<32x32xf32>
    %55 = vector.extract_strided_slice %33 {offsets = [1, 0], sizes = [1, 32], strides = [1, 1]} : vector<2x32xf32> to vector<1x32xf32>
    %56 = vector.broadcast %55 : vector<1x32xf32> to vector<32x32xf32>
    %57 = arith.addf %54, %56 : vector<32x32xf32>
    %c0_21 = arith.constant 0 : index
    %c0_22 = arith.constant 0 : index
    %58 = vector.load %arg6[%c0_21, %c0_22] : memref<32x32xf32, #tpu.memory_space<vmem>>, vector<32x32xf32>
    %59 = arith.addf %57, %58 : vector<32x32xf32>
    %c0_23 = arith.constant 0 : index
    %c0_24 = arith.constant 0 : index
    %60 = vector.load %arg7[%c0_23, %c0_24] : memref<32x32xf32, #tpu.memory_space<vmem>>, vector<32x32xf32>
    tpu.vector_store %arg7[%c0_23, %c0_24], %59 {strides = array<i32>} : memref<32x32xf32, #tpu.memory_space<vmem>>, vector<32x32xf32>,
    return
  }
  func.func @transform_0(%arg0: i32) -> (i32, i32) {
    %c0_i32 = arith.constant 0 : i32
    %c0_i32_0 = arith.constant 0 : i32
    %c0_i32_1 = arith.constant 0 : i32
    return %c0_i32, %c0_i32_0 : i32, i32
  }
  func.func @transform_1(%arg0: i32) -> (i32, i32) {
    %c0_i32 = arith.constant 0 : i32
    %c0_i32_0 = arith.constant 0 : i32
    %c0_i32_1 = arith.constant 0 : i32
    return %c0_i32, %c0_i32_0 : i32, i32
  }
  func.func @transform_2(%arg0: i32) -> (i32, i32) {
    %c0_i32 = arith.constant 0 : i32
    %c0_i32_0 = arith.constant 0 : i32
    %c0_i32_1 = arith.constant 0 : i32
    return %c0_i32, %c0_i32_0 : i32, i32
  }
  func.func @transform_3(%arg0: i32) -> (i32, i32) {
    %c0_i32 = arith.constant 0 : i32
    %c0_i32_0 = arith.constant 0 : i32
    %c0_i32_1 = arith.constant 0 : i32
    return %c0_i32, %c0_i32_0 : i32, i32
  }
  func.func @transform_4(%arg0: i32) -> (i32, i32) {
    %c0_i32 = arith.constant 0 : i32
    %c0_i32_0 = arith.constant 0 : i32
    %c0_i32_1 = arith.constant 0 : i32
    return %c0_i32, %c0_i32_0 : i32, i32
  }
  func.func @transform_5(%arg0: i32) -> (i32, i32) {
    %c0_i32 = arith.constant 0 : i32
    %c0_i32_0 = arith.constant 0 : i32
    %c0_i32_1 = arith.constant 0 : i32
    return %c0_i32, %c0_i32_0 : i32, i32
  }
  func.func @transform_6(%arg0: i32) -> (i32, i32) {
    %c0_i32 = arith.constant 0 : i32
    %c0_i32_0 = arith.constant 0 : i32
    %c0_i32_1 = arith.constant 0 : i32
    return %c0_i32, %c0_i32_0 : i32, i32
  }
}

module attributes {stable_mosaic.version = 11 : i64} {
  func.func @_residual_block_kernel(%arg0: i32, %arg1: memref<32x288xbf16, #tpu.memory_space<vmem>>, %arg2: memref<288x16xbf16, #tpu.memory_space<vmem>>, %arg3: memref<2x16xf32, #tpu.memory_space<vmem>>, %arg4: memref<16x32xbf16, #tpu.memory_space<vmem>>, %arg5: memref<2x32xf32, #tpu.memory_space<vmem>>, %arg6: memref<32x32xf32, #tpu.memory_space<vmem>>, %arg7: memref<32x32xf32, #tpu.memory_space<vmem>>) attributes {dimension_semantics = [#tpu.dimension_semantics<arbitrary>], iteration_bounds = array<i64: 1>, scalar_prefetch = 0 : i64, scratch_operands = 0 : i64, tpu.core_type = #tpu.core_type<tc>, window_params = [{pipeline_mode = #tpu.pipeline_mode<synchronous>, transform_indices = @transform_0, window_bounds = array<i64: 32, 288>}, {pipeline_mode = #tpu.pipeline_mode<synchronous>, transform_indices = @transform_1, window_bounds = array<i64: 288, 16>}, {pipeline_mode = #tpu.pipeline_mode<synchronous>, transform_indices = @transform_2, window_bounds = array<i64: 2, 16>}, {pipeline_mode = #tpu.pipeline_mode<synchronous>, transform_indices = @transform_3, window_bounds = array<i64: 16, 32>}, {pipeline_mode = #tpu.pipeline_mode<synchronous>, transform_indices = @transform_4, window_bounds = array<i64: 2, 32>}, {pipeline_mode = #tpu.pipeline_mode<synchronous>, transform_indices = @transform_5, window_bounds = array<i64: 32, 32>}, {pipeline_mode = #tpu.pipeline_mode<synchronous>, transform_indices = @transform_6, window_bounds = array<i64: 32, 32>}]} {
    %c0 = arith.constant 0 : index
    %c0_0 = arith.constant 0 : index
    %0 = vector.load %arg1[%c0, %c0_0] : memref<32x288xbf16, #tpu.memory_space<vmem>>, vector<32x288xbf16>
    %c0_1 = arith.constant 0 : index
    %c0_2 = arith.constant 0 : index
    %1 = vector.load %arg2[%c0_1, %c0_2] : memref<288x16xbf16, #tpu.memory_space<vmem>>, vector<288x16xbf16>
    %cst = arith.constant dense<0.000000e+00> : vector<32x16xf32>
    %2 = tpu.matmul %0, %1, %cst {dimension_numbers = #tpu.dot_dimension_numbers<[1], [0], [0], [1], [0, 0, 1, 1], [], []>} : vector<32x288xbf16>, vector<288x16xbf16>, vector<32x16xf32> -> vector<32x16xf32>
    %c0_3 = arith.constant 0 : index
    %c0_4 = arith.constant 0 : index
    %3 = vector.load %arg3[%c0_3, %c0_4] : memref<2x16xf32, #tpu.memory_space<vmem>>, vector<2x16xf32>
    %cst_5 = arith.constant dense<0.000000e+00> : vector<16xf32>
    %4 = vector.multi_reduction <add>, %2, %cst_5 [0] : vector<32x16xf32> to vector<16xf32>
    %5 = vector.shape_cast %4 : vector<16xf32> to vector<1x16xf32>
    %cst_6 = arith.constant 3.125000e-02 : f32
    %6 = vector.broadcast %cst_6 : f32 to vector<1x16xf32>
    %7 = arith.mulf %5, %6 : vector<1x16xf32>
    %8 = arith.mulf %2, %2 : vector<32x16xf32>
    %cst_7 = arith.constant dense<0.000000e+00> : vector<16xf32>
    %9 = vector.multi_reduction <add>, %8, %cst_7 [0] : vector<32x16xf32> to vector<16xf32>
    %10 = vector.shape_cast %9 : vector<16xf32> to vector<1x16xf32>
    %cst_8 = arith.constant 3.125000e-02 : f32
    %11 = vector.broadcast %cst_8 : f32 to vector<1x16xf32>
    %12 = arith.mulf %10, %11 : vector<1x16xf32>
    %13 = arith.mulf %7, %7 : vector<1x16xf32>
    %14 = arith.subf %12, %13 : vector<1x16xf32>
    %15 = vector.broadcast %7 : vector<1x16xf32> to vector<32x16xf32>
    %16 = arith.subf %2, %15 : vector<32x16xf32>
    %cst_9 = arith.constant 9.99999974E-6 : f32
    %17 = vector.broadcast %cst_9 : f32 to vector<1x16xf32>
    %18 = arith.addf %14, %17 : vector<1x16xf32>
    %19 = math.rsqrt %18 : vector<1x16xf32>
    %20 = vector.broadcast %19 : vector<1x16xf32> to vector<32x16xf32>
    %21 = arith.mulf %16, %20 : vector<32x16xf32>
    %22 = vector.extract_strided_slice %3 {offsets = [0, 0], sizes = [1, 16], strides = [1, 1]} : vector<2x16xf32> to vector<1x16xf32>
    %23 = vector.broadcast %22 : vector<1x16xf32> to vector<32x16xf32>
    %24 = arith.mulf %21, %23 : vector<32x16xf32>
    %25 = vector.extract_strided_slice %3 {offsets = [1, 0], sizes = [1, 16], strides = [1, 1]} : vector<2x16xf32> to vector<1x16xf32>
    %26 = vector.broadcast %25 : vector<1x16xf32> to vector<32x16xf32>
    %27 = arith.addf %24, %26 : vector<32x16xf32>
    %cst_10 = arith.constant 0.000000e+00 : f32
    %28 = vector.broadcast %cst_10 : f32 to vector<32x16xf32>
    %29 = arith.maximumf %27, %28 : vector<32x16xf32>
    %30 = arith.truncf %29 : vector<32x16xf32> to vector<32x16xbf16>
    %c0_11 = arith.constant 0 : index
    %c0_12 = arith.constant 0 : index
    %31 = vector.load %arg4[%c0_11, %c0_12] : memref<16x32xbf16, #tpu.memory_space<vmem>>, vector<16x32xbf16>
    %cst_13 = arith.constant dense<0.000000e+00> : vector<32x32xf32>
    %32 = tpu.matmul %30, %31, %cst_13 {dimension_numbers = #tpu.dot_dimension_numbers<[1], [0], [0], [1], [0, 0, 1, 1], [], []>} : vector<32x16xbf16>, vector<16x32xbf16>, vector<32x32xf32> -> vector<32x32xf32>
    %c0_14 = arith.constant 0 : index
    %c0_15 = arith.constant 0 : index
    %33 = vector.load %arg5[%c0_14, %c0_15] : memref<2x32xf32, #tpu.memory_space<vmem>>, vector<2x32xf32>
    %cst_16 = arith.constant dense<0.000000e+00> : vector<32xf32>
    %34 = vector.multi_reduction <add>, %32, %cst_16 [0] : vector<32x32xf32> to vector<32xf32>
    %35 = vector.shape_cast %34 : vector<32xf32> to vector<1x32xf32>
    %cst_17 = arith.constant 3.125000e-02 : f32
    %36 = vector.broadcast %cst_17 : f32 to vector<1x32xf32>
    %37 = arith.mulf %35, %36 : vector<1x32xf32>
    %38 = arith.mulf %32, %32 : vector<32x32xf32>
    %cst_18 = arith.constant dense<0.000000e+00> : vector<32xf32>
    %39 = vector.multi_reduction <add>, %38, %cst_18 [0] : vector<32x32xf32> to vector<32xf32>
    %40 = vector.shape_cast %39 : vector<32xf32> to vector<1x32xf32>
    %cst_19 = arith.constant 3.125000e-02 : f32
    %41 = vector.broadcast %cst_19 : f32 to vector<1x32xf32>
    %42 = arith.mulf %40, %41 : vector<1x32xf32>
    %43 = arith.mulf %37, %37 : vector<1x32xf32>
    %44 = arith.subf %42, %43 : vector<1x32xf32>
    %45 = vector.broadcast %37 : vector<1x32xf32> to vector<32x32xf32>
    %46 = arith.subf %32, %45 : vector<32x32xf32>
    %cst_20 = arith.constant 9.99999974E-6 : f32
    %47 = vector.broadcast %cst_20 : f32 to vector<1x32xf32>
    %48 = arith.addf %44, %47 : vector<1x32xf32>
    %49 = math.rsqrt %48 : vector<1x32xf32>
    %50 = vector.broadcast %49 : vector<1x32xf32> to vector<32x32xf32>
    %51 = arith.mulf %46, %50 : vector<32x32xf32>
    %52 = vector.extract_strided_slice %33 {offsets = [0, 0], sizes = [1, 32], strides = [1, 1]} : vector<2x32xf32> to vector<1x32xf32>
    %53 = vector.broadcast %52 : vector<1x32xf32> to vector<32x32xf32>
    %54 = arith.mulf %51, %53 : vector<32x32xf32>
    %55 = vector.extract_strided_slice %33 {offsets = [1, 0], sizes = [1, 32], strides = [1, 1]} : vector<2x32xf32> to vector<1x32xf32>
    %56 = vector.broadcast %55 : vector<1x32xf32> to vector<32x32xf32>
    %57 = arith.addf %54, %56 : vector<32x32xf32>
    %c0_21 = arith.constant 0 : index
    %c0_22 = arith.constant 0 : index
    %58 = vector.load %arg6[%c0_21, %c0_22] : memref<32x32xf32, #tpu.memory_space<vmem>>, vector<32x32xf32>
    %59 = arith.addf %57, %58 : vector<32x32xf32>
    %cst_23 = arith.constant 0.000000e+00 : f32
    %60 = vector.broadcast %cst_23 : f32 to vector<32x32xf32>
    %61 = arith.maximumf %59, %60 : vector<32x32xf32>
    %c0_24 = arith.constant 0 : index
    %c0_25 = arith.constant 0 : index
    %62 = vector.load %arg7[%c0_24, %c0_25] : memref<32x32xf32, #tpu.memory_space<vmem>>, vector<32x32xf32>
    tpu.vector_store %arg7[%c0_24, %c0_25], %61 {strides = array<i32>} : memref<32x32xf32, #tpu.memory_space<vmem>>, vector<32x32xf32>,
    return
  }
  func.func @transform_0(%arg0: i32) -> (i32, i32) {
    %c0_i32 = arith.constant 0 : i32
    %c0_i32_0 = arith.constant 0 : i32
    %c0_i32_1 = arith.constant 0 : i32
    return %c0_i32, %c0_i32_0 : i32, i32
  }
  func.func @transform_1(%arg0: i32) -> (i32, i32) {
    %c0_i32 = arith.constant 0 : i32
    %c0_i32_0 = arith.constant 0 : i32
    %c0_i32_1 = arith.constant 0 : i32
    return %c0_i32, %c0_i32_0 : i32, i32
  }
  func.func @transform_2(%arg0: i32) -> (i32, i32) {
    %c0_i32 = arith.constant 0 : i32
    %c0_i32_0 = arith.constant 0 : i32
    %c0_i32_1 = arith.constant 0 : i32
    return %c0_i32, %c0_i32_0 : i32, i32
  }
  func.func @transform_3(%arg0: i32) -> (i32, i32) {
    %c0_i32 = arith.constant 0 : i32
    %c0_i32_0 = arith.constant 0 : i32
    %c0_i32_1 = arith.constant 0 : i32
    return %c0_i32, %c0_i32_0 : i32, i32
  }
  func.func @transform_4(%arg0: i32) -> (i32, i32) {
    %c0_i32 = arith.constant 0 : i32
    %c0_i32_0 = arith.constant 0 : i32
    %c0_i32_1 = arith.constant 0 : i32
    return %c0_i32, %c0_i32_0 : i32, i32
  }
  func.func @transform_5(%arg0: i32) -> (i32, i32) {
    %c0_i32 = arith.constant 0 : i32
    %c0_i32_0 = arith.constant 0 : i32
    %c0_i32_1 = arith.constant 0 : i32
    return %c0_i32, %c0_i32_0 : i32, i32
  }
  func.func @transform_6(%arg0: i32) -> (i32, i32) {
    %c0_i32 = arith.constant 0 : i32
    %c0_i32_0 = arith.constant 0 : i32
    %c0_i32_1 = arith.constant 0 : i32
    return %c0_i32, %c0_i32_0 : i32, i32
  }
}

</mosaic_0001>

<llo_original>
// kernel: encoder_forward.4
$region0: #{encoder_forward.4}
  #allocation0 [shape = 'u32[]', space=smem, size = 0x4, offset = 0x4, fixed_abs, tag = 'smem constant byte address 0x4 - core index']
  #allocation1 [shape = 'u32[144,128]{1,0:T(1,128)}', space=vmem, size = 0x12000, scoped, tag = 'internal scratch']
  %s0 = inlined_call_operand.vmem [shape: bf16[128,64], index: 0, kind: input, shape index: {}]
  %s1 = inlined_call_operand.vmem [shape: bf16[64,16], index: 1, kind: input, shape index: {}]
  %s2 = inlined_call_operand.vmem [shape: f32[3,16], index: 2, kind: input, shape index: {}]
  %s3 = inlined_call_operand.vmem [shape: f32[128,16], index: 3, kind: output, shape index: {}]
  %s4 = sld [smem:[#allocation0]]
  $region22: #{encoder_forward.4} parent=0
    _
  %s6 = ssub.s32 1, %s4
  %s7 = scalar_select 0, %s6, %s4
  // Predicated region
  $region2: #{encoder_forward.4} parent=0 // pred_check
    _
  $region3: #{encoder_forward.4} parent=0 // pred_check_branch
    %9 = sbr.rel (0) target = $region5
  $region4: #{encoder_forward.4} parent=0 // pred_region
    _
  $region5: #{encoder_forward.4} parent=0 // pred_fallthru
    _
  // Predicated region
  $region6: #{encoder_forward.4} parent=0 // pred_check
    _
  $region7: #{encoder_forward.4} parent=0 // pred_check_branch
    %11 = sbr.rel (0) target = $region9
  $region8: #{encoder_forward.4} parent=0 // pred_region
    _
  $region9: #{encoder_forward.4} parent=0 // pred_fallthru
    _
  // Predicated region
  $region10: #{encoder_forward.4} parent=0 // pred_check
    _
  $region11: #{encoder_forward.4} parent=0 // pred_check_branch
    %13 = sbr.rel (0) target = $region13
  $region12: #{encoder_forward.4} parent=0 // pred_region
    _
  $region13: #{encoder_forward.4} parent=0 // pred_fallthru
    _
  %v15 = vld [vmem:[%s0] sm:$0xf]
  %v16 = vld [vmem:[%s0 + $0x4] sm:$0xf]
  %v17 = vld [vmem:[%s0 + $0x8] sm:$0xf]
  %v18 = vld [vmem:[%s0 + $0xc] sm:$0xf]
  %v19 = vld [vmem:[%s0 + $0x10] sm:$0xf]
  %v20 = vld [vmem:[%s0 + $0x14] sm:$0xf]
  %v21 = vld [vmem:[%s0 + $0x18] sm:$0xf]
  %v22 = vld [vmem:[%s0 + $0x1c] sm:$0xf]
  %v23 = vld [vmem:[%s0 + $0x20] sm:$0xf]
  %v24 = vld [vmem:[%s0 + $0x24] sm:$0xf]
  %v25 = vld [vmem:[%s0 + $0x28] sm:$0xf]
  %v26 = vld [vmem:[%s0 + $0x2c] sm:$0xf]
  %v27 = vld [vmem:[%s0 + $0x30] sm:$0xf]
  %v28 = vld [vmem:[%s0 + $0x34] sm:$0xf]
  %v29 = vld [vmem:[%s0 + $0x38] sm:$0xf]
  %v30 = vld [vmem:[%s0 + $0x3c] sm:$0xf]
  %v31 = vld [vmem:[%s1] sm:$0xf]
  %v32 = vld [vmem:[%s1 + $0x4] sm:$0xf]
  %v33 = vld [vmem:[%s1 + $0x8] sm:$0xf]
  %v34 = vld [vmem:[%s1 + $0xc] sm:$0xf]
  %v35 = vld [vmem:[%s1 + $0x10] sm:$0xf]
  %v36 = vld [vmem:[%s1 + $0x14] sm:$0xf]
  %v37 = vld [vmem:[%s1 + $0x18] sm:$0xf]
  %v38 = vld [vmem:[%s1 + $0x1c] sm:$0xf]
  %v39 = vld [vmem:[%s2] sm:$0x7]
  %v40 = vlaneseq
  %v41 = vshrl.u32 %v40, 7
  %v42 = vsub.s32 0, %v41
  %v43 = vrot.slane %v39, %v42
  %v60 = vunpack.c.l.b16 %v15
  %v61 = vunpack.c.l.b16 %v16
  %v62 = vunpack.c.l.b16 %v17
  %v63 = vunpack.c.l.b16 %v18
  %v64 = vunpack.c.l.b16 %v19
  %v65 = vunpack.c.l.b16 %v20
  %v66 = vunpack.c.l.b16 %v21
  %v67 = vunpack.c.l.b16 %v22
  %v68 = vunpack.c.l.b16 %v23
  %v69 = vunpack.c.l.b16 %v24
  %v70 = vunpack.c.l.b16 %v25
  %v71 = vunpack.c.l.b16 %v26
  %v72 = vunpack.c.l.b16 %v27
  %v73 = vunpack.c.l.b16 %v28
  %v74 = vunpack.c.l.b16 %v29
  %v75 = vunpack.c.l.b16 %v30
  %v76 = vpack.c.b16 %v61, %v60
  %v77 = vpack.c.b16 %v63, %v62
  %v78 = vpack.c.b16 %v65, %v64
  %v79 = vpack.c.b16 %v67, %v66
  %v80 = vpack.c.b16 %v69, %v68
  %v81 = vpack.c.b16 %v71, %v70
  %v82 = vpack.c.b16 %v73, %v72
  %v83 = vpack.c.b16 %v75, %v74
  %v92 = vunpack.c.l.b16 %v31
  %v93 = vunpack.c.l.b16 %v32
  %v94 = vunpack.c.l.b16 %v33
  %v95 = vunpack.c.l.b16 %v34
  %v96 = vunpack.c.l.b16 %v35
  %v97 = vunpack.c.l.b16 %v36
  %v98 = vunpack.c.l.b16 %v37
  %v99 = vunpack.c.l.b16 %v38
  %v100 = vpack.c.b16 %v93, %v92
  %v101 = vpack.c.b16 %v95, %v94
  %v102 = vpack.c.b16 %v97, %v96
  %v103 = vpack.c.b16 %v99, %v98
  %vm108 = vcmask 523264
  %v110 = vsel %vm108, %v76, 0
  %v113 = vsel %vm108, %v77, 0
  %v116 = vsel %vm108, %v78, 0
  %v119 = vsel %vm108, %v79, 0
  %v122 = vsel %vm108, %v80, 0
  %v125 = vsel %vm108, %v81, 0
  %v128 = vsel %vm108, %v82, 0
  %v131 = vsel %vm108, %v83, 0
  %133 = vmatprep.subr.bf16.mxu0 0
  %134 = vmatpush1.bf16.msra.mxu0 %v100
  %135 = vmatprep.subr.bf16.mxu0 0
  %136 = vmatpush1.bf16.msra.mxu0 %v101
  %137 = vmatprep.subr.bf16.mxu0 0
  %138 = vmatpush1.bf16.msra.mxu0 %v102
  %139 = vmatprep.subr.bf16.mxu0 0
  %140 = vmatpush1.bf16.msra.mxu0 %v103
  %141 = vmatprep.subr.bf16.mxu0 0
  %142 = vmatpush1.bf16.msra.mxu0 0
  %143 = vmatprep.subr.bf16.mxu0 0
  %144 = vmatpush1.bf16.msra.mxu0 0
  %145 = vmatprep.subr.bf16.mxu0 0
  %146 = vmatpush1.bf16.msra.mxu0 0
  %147 = vmatprep.subr.bf16.mxu0 0
  %148 = vmatpush1.bf16.msra.mxu0 0
  %149 = vmatprep.subr.bf16.mxu0 0
  %150 = vmatpush1.bf16.msra.mxu0 0
  %151 = vmatprep.subr.bf16.mxu0 0
  %152 = vmatpush1.bf16.msra.mxu0 0
  %153 = vmatprep.subr.bf16.mxu0 0
  %154 = vmatpush1.bf16.msra.mxu0 0
  %155 = vmatprep.subr.bf16.mxu0 0
  %156 = vmatpush1.bf16.msra.mxu0 0
  %157 = vmatprep.subr.bf16.mxu0 0
  %158 = vmatpush1.bf16.msra.mxu0 0
  %159 = vmatprep.subr.bf16.mxu0 0
  %160 = vmatpush1.bf16.msra.mxu0 0
  %161 = vmatprep.subr.bf16.mxu0 0
  %162 = vmatpush1.bf16.msra.mxu0 0
  %163 = vmatprep.subr.bf16.mxu0 0
  %164 = vmatpush1.bf16.msra.mxu0 0
  %165 = vmatprep.mubr.bf16.mxu0 0
  %166 = vmatmul.mubr.bf16.gmra.mrb[0].mxu0 %v110
  %v167 = vpop.f32.mrb[0].mxu0
  %v168 = vadd.f32 %v43, %v167
  %v169 = vpop.f32.mrb[0].mxu0
  %v170 = vpop.f32.mrb[0].mxu0
  %v171 = vadd.f32 %v43, %v170
  %v172 = vpop.f32.mrb[0].mxu0
  %173 = vmatprep.mubr.bf16.mxu0 0
  %174 = vmatmul.mubr.bf16.gmra.mrb[0].mxu0 %v113
  %v175 = vpop.f32.mrb[0].mxu0
  %v176 = vadd.f32 %v43, %v175
  %v177 = vpop.f32.mrb[0].mxu0
  %v178 = vpop.f32.mrb[0].mxu0
  %v179 = vadd.f32 %v43, %v178
  %v180 = vpop.f32.mrb[0].mxu0
  %181 = vmatprep.mubr.bf16.mxu0 0
  %182 = vmatmul.mubr.bf16.gmra.mrb[0].mxu0 %v116
  %v183 = vpop.f32.mrb[0].mxu0
  %v184 = vadd.f32 %v43, %v183
  %v185 = vpop.f32.mrb[0].mxu0
  %v186 = vpop.f32.mrb[0].mxu0
  %v187 = vadd.f32 %v43, %v186
  %v188 = vpop.f32.mrb[0].mxu0
  %189 = vmatprep.mubr.bf16.mxu0 0
  %190 = vmatmul.mubr.bf16.gmra.mrb[0].mxu0 %v119
  %v191 = vpop.f32.mrb[0].mxu0
  %v192 = vadd.f32 %v43, %v191
  %v193 = vpop.f32.mrb[0].mxu0
  %v194 = vpop.f32.mrb[0].mxu0
  %v195 = vadd.f32 %v43, %v194
  %v196 = vpop.f32.mrb[0].mxu0
  %197 = vmatprep.mubr.bf16.mxu0 0
  %198 = vmatmul.mubr.bf16.gmra.mrb[0].mxu0 %v122
  %v199 = vpop.f32.mrb[0].mxu0
  %v200 = vadd.f32 %v43, %v199
  %v201 = vpop.f32.mrb[0].mxu0
  %v202 = vpop.f32.mrb[0].mxu0
  %v203 = vadd.f32 %v43, %v202
  %v204 = vpop.f32.mrb[0].mxu0
  %205 = vmatprep.mubr.bf16.mxu0 0
  %206 = vmatmul.mubr.bf16.gmra.mrb[0].mxu0 %v125
  %v207 = vpop.f32.mrb[0].mxu0
  %v208 = vadd.f32 %v43, %v207
  %v209 = vpop.f32.mrb[0].mxu0
  %v210 = vpop.f32.mrb[0].mxu0
  %v211 = vadd.f32 %v43, %v210
  %v212 = vpop.f32.mrb[0].mxu0
  %213 = vmatprep.mubr.bf16.mxu0 0
  %214 = vmatmul.mubr.bf16.gmra.mrb[0].mxu0 %v128
  %v215 = vpop.f32.mrb[0].mxu0
  %v216 = vadd.f32 %v43, %v215
  %v217 = vpop.f32.mrb[0].mxu0
  %v218 = vpop.f32.mrb[0].mxu0
  %v219 = vadd.f32 %v43, %v218
  %v220 = vpop.f32.mrb[0].mxu0
  %221 = vmatprep.mubr.bf16.mxu0 0
  %222 = vmatmul.mubr.bf16.gmra.mrb[0].mxu0 %v131
  %v223 = vpop.f32.mrb[0].mxu0
  %v224 = vadd.f32 %v43, %v223
  %v225 = vpop.f32.mrb[0].mxu0
  %v226 = vpop.f32.mrb[0].mxu0
  %v227 = vadd.f32 %v43, %v226
  %v228 = vpop.f32.mrb[0].mxu0
  %229 = vdwg.mxu0
  %vm230 = vcmask 130048
  %v231 = vsel %vm230, %v168, 0.0
  %v232 = vsel %vm230, %v171, 0.0
  %v233 = vadd.f32 %v231, %v232
  %v234 = vsel %vm230, %v176, 0.0
  %v235 = vadd.f32 %v233, %v234
  %v236 = vsel %vm230, %v179, 0.0
  %v237 = vadd.f32 %v235, %v236
  %v238 = vsel %vm230, %v184, 0.0
  %v239 = vadd.f32 %v237, %v238
  %v240 = vsel %vm230, %v187, 0.0
  %v241 = vadd.f32 %v239, %v240
  %v242 = vsel %vm230, %v192, 0.0
  %v243 = vadd.f32 %v241, %v242
  %v244 = vsel %vm230, %v195, 0.0
  %v245 = vadd.f32 %v243, %v244
  %v246 = vsel %vm230, %v200, 0.0
  %v247 = vadd.f32 %v245, %v246
  %v248 = vsel %vm230, %v203, 0.0
  %v249 = vadd.f32 %v247, %v248
  %v250 = vsel %vm230, %v208, 0.0
  %v251 = vadd.f32 %v249, %v250
  %v252 = vsel %vm230, %v211, 0.0
  %v253 = vadd.f32 %v251, %v252
  %v254 = vsel %vm230, %v216, 0.0
  %v255 = vadd.f32 %v253, %v254
  %v256 = vsel %vm230, %v219, 0.0
  %v257 = vadd.f32 %v255, %v256
  %v258 = vsel %vm230, %v224, 0.0
  %v259 = vadd.f32 %v257, %v258
  %v260 = vsel %vm230, %v227, 0.0
  %v261 = vadd.f32 %v259, %v260
  %v262 = vrot.slane %v261, 4
  %v263 = vadd.f32 %v261, %v262
  %v264 = vrot.slane %v263, 2
  %v265 = vadd.f32 %v263, %v264
  %v266 = vrot.slane %v265, 1
  %v267 = vadd.f32 %v265, %v266
  %v268 = vmul.f32 %v267, 0.0078125
  %v269 = vmul.f32 %v168, %v168
  %v270 = vmul.f32 %v171, %v171
  %v271 = vmul.f32 %v176, %v176
  %v272 = vmul.f32 %v179, %v179
  %v273 = vmul.f32 %v184, %v184
  %v274 = vmul.f32 %v187, %v187
  %v275 = vmul.f32 %v192, %v192
  %v276 = vmul.f32 %v195, %v195
  %v277 = vmul.f32 %v200, %v200
  %v278 = vmul.f32 %v203, %v203
  %v279 = vmul.f32 %v208, %v208
  %v280 = vmul.f32 %v211, %v211
  %v281 = vmul.f32 %v216, %v216
  %v282 = vmul.f32 %v219, %v219
  %v283 = vmul.f32 %v224, %v224
  %v284 = vmul.f32 %v227, %v227
  %v285 = vsel %vm230, %v269, 0.0
  %v286 = vsel %vm230, %v270, 0.0
  %v287 = vadd.f32 %v285, %v286
  %v288 = vsel %vm230, %v271, 0.0
  %v289 = vadd.f32 %v287, %v288
  %v290 = vsel %vm230, %v272, 0.0
  %v291 = vadd.f32 %v289, %v290
  %v292 = vsel %vm230, %v273, 0.0
  %v293 = vadd.f32 %v291, %v292
  %v294 = vsel %vm230, %v274, 0.0
  %v295 = vadd.f32 %v293, %v294
  %v296 = vsel %vm230, %v275, 0.0
  %v297 = vadd.f32 %v295, %v296
  %v298 = vsel %vm230, %v276, 0.0
  %v299 = vadd.f32 %v297, %v298
  %v300 = vsel %vm230, %v277, 0.0
  %v301 = vadd.f32 %v299, %v300
  %v302 = vsel %vm230, %v278, 0.0
  %v303 = vadd.f32 %v301, %v302
  %v304 = vsel %vm230, %v279, 0.0
  %v305 = vadd.f32 %v303, %v304
  %v306 = vsel %vm230, %v280, 0.0
  %v307 = vadd.f32 %v305, %v306
  %v308 = vsel %vm230, %v281, 0.0
  %v309 = vadd.f32 %v307, %v308
  %v310 = vsel %vm230, %v282, 0.0
  %v311 = vadd.f32 %v309, %v310
  %v312 = vsel %vm230, %v283, 0.0
  %v313 = vadd.f32 %v311, %v312
  %v314 = vsel %vm230, %v284, 0.0
  %v315 = vadd.f32 %v313, %v314
  %v316 = vrot.slane %v315, 4
  %v317 = vadd.f32 %v315, %v316
  %v318 = vrot.slane %v317, 2
  %v319 = vadd.f32 %v317, %v318
  %v320 = vrot.slane %v319, 1
  %v321 = vadd.f32 %v319, %v320
  %v322 = vmul.f32 %v321, 0.0078125
  %v323 = vmul.f32 %v268, %v268
  %v324 = vsub.f32 %v322, %v323
  %v325 = vsub.f32 %v168, %v268
  %v326 = vsub.f32 %v171, %v268
  %v327 = vsub.f32 %v176, %v268
  %v328 = vsub.f32 %v179, %v268
  %v329 = vsub.f32 %v184, %v268
  %v330 = vsub.f32 %v187, %v268
  %v331 = vsub.f32 %v192, %v268
  %v332 = vsub.f32 %v195, %v268
  %v333 = vsub.f32 %v200, %v268
  %v334 = vsub.f32 %v203, %v268
  %v335 = vsub.f32 %v208, %v268
  %v336 = vsub.f32 %v211, %v268
  %v337 = vsub.f32 %v216, %v268
  %v338 = vsub.f32 %v219, %v268
  %v339 = vsub.f32 %v224, %v268
  %v340 = vsub.f32 %v227, %v268
  %v341 = vadd.f32 %v324, 1e-05
  %v342 = vrsqrt.pop %v341
  %v343 = vmul.f32 %v325, %v342
  %v344 = vmul.f32 %v326, %v342
  %v345 = vmul.f32 %v327, %v342
  %v346 = vmul.f32 %v328, %v342
  %v347 = vmul.f32 %v329, %v342
  %v348 = vmul.f32 %v330, %v342
  %v349 = vmul.f32 %v331, %v342
  %v350 = vmul.f32 %v332, %v342
  %v351 = vmul.f32 %v333, %v342
  %v352 = vmul.f32 %v334, %v342
  %v353 = vmul.f32 %v335, %v342
  %v354 = vmul.f32 %v336, %v342
  %v355 = vmul.f32 %v337, %v342
  %v356 = vmul.f32 %v338, %v342
  %v357 = vmul.f32 %v339, %v342
  %v358 = vmul.f32 %v340, %v342
  %v359 = vlaneseq
  %v360 = vshrl.u32 %v359, 7
  %v361 = vsub.s32 1, %v360
  %v362 = vrot.slane %v39, %v361
  %v363 = vmul.f32 %v343, %v362
  %v364 = vmul.f32 %v344, %v362
  %v365 = vmul.f32 %v345, %v362
  %v366 = vmul.f32 %v346, %v362
  %v367 = vmul.f32 %v347, %v362
  %v368 = vmul.f32 %v348, %v362
  %v369 = vmul.f32 %v349, %v362
  %v370 = vmul.f32 %v350, %v362
  %v371 = vmul.f32 %v351, %v362
  %v372 = vmul.f32 %v352, %v362
  %v373 = vmul.f32 %v353, %v362
  %v374 = vmul.f32 %v354, %v362
  %v375 = vmul.f32 %v355, %v362
  %v376 = vmul.f32 %v356, %v362
  %v377 = vmul.f32 %v357, %v362
  %v378 = vmul.f32 %v358, %v362
  %v379 = vlaneseq
  %v380 = vshrl.u32 %v379, 7
  %v381 = vsub.s32 2, %v380
  %v382 = vrot.slane %v39, %v381
  %v383 = vadd.f32 %v363, %v382
  %v384 = vadd.f32 %v364, %v382
  %v385 = vadd.f32 %v365, %v382
  %v386 = vadd.f32 %v366, %v382
  %v387 = vadd.f32 %v367, %v382
  %v388 = vadd.f32 %v368, %v382
  %v389 = vadd.f32 %v369, %v382
  %v390 = vadd.f32 %v370, %v382
  %v391 = vadd.f32 %v371, %v382
  %v392 = vadd.f32 %v372, %v382
  %v393 = vadd.f32 %v373, %v382
  %v394 = vadd.f32 %v374, %v382
  %v395 = vadd.f32 %v375, %v382
  %v396 = vadd.f32 %v376, %v382
  %v397 = vadd.f32 %v377, %v382
  %v398 = vadd.f32 %v378, %v382
  %v399 = vmax.f32 %v383, 0.0
  %v400 = vmax.f32 %v384, 0.0
  %v401 = vmax.f32 %v385, 0.0
  %v402 = vmax.f32 %v386, 0.0
  %v403 = vmax.f32 %v387, 0.0
  %v404 = vmax.f32 %v388, 0.0
  %v405 = vmax.f32 %v389, 0.0
  %v406 = vmax.f32 %v390, 0.0
  %v407 = vmax.f32 %v391, 0.0
  %v408 = vmax.f32 %v392, 0.0
  %v409 = vmax.f32 %v393, 0.0
  %v410 = vmax.f32 %v394, 0.0
  %v411 = vmax.f32 %v395, 0.0
  %v412 = vmax.f32 %v396, 0.0
  %v413 = vmax.f32 %v397, 0.0
  %v414 = vmax.f32 %v398, 0.0
  %415 = vst.msk [vmem:[%s3] sm:$0xff] %vm230, %v399
  %416 = vst.msk [vmem:[%s3 + $0x8] sm:$0xff] %vm230, %v400
  %417 = vst.msk [vmem:[%s3 + $0x10] sm:$0xff] %vm230, %v401
  %418 = vst.msk [vmem:[%s3 + $0x18] sm:$0xff] %vm230, %v402
  %419 = vst.msk [vmem:[%s3 + $0x20] sm:$0xff] %vm230, %v403
  %420 = vst.msk [vmem:[%s3 + $0x28] sm:$0xff] %vm230, %v404
  %421 = vst.msk [vmem:[%s3 + $0x30] sm:$0xff] %vm230, %v405
  %422 = vst.msk [vmem:[%s3 + $0x38] sm:$0xff] %vm230, %v406
  %423 = vst.msk [vmem:[%s3 + $0x40] sm:$0xff] %vm230, %v407
  %424 = vst.msk [vmem:[%s3 + $0x48] sm:$0xff] %vm230, %v408
  %425 = vst.msk [vmem:[%s3 + $0x50] sm:$0xff] %vm230, %v409
  %426 = vst.msk [vmem:[%s3 + $0x58] sm:$0xff] %vm230, %v410
  %427 = vst.msk [vmem:[%s3 + $0x60] sm:$0xff] %vm230, %v411
  %428 = vst.msk [vmem:[%s3 + $0x68] sm:$0xff] %vm230, %v412
  %429 = vst.msk [vmem:[%s3 + $0x70] sm:$0xff] %vm230, %v413
  %430 = vst.msk [vmem:[%s3 + $0x78] sm:$0xff] %vm230, %v414
  // Predicated region
  $region14: #{encoder_forward.4} parent=0 // pred_check
    _
  $region15: #{encoder_forward.4} parent=0 // pred_check_branch
    %432 = sbr.rel (0) target = $region17
  $region16: #{encoder_forward.4} parent=0 // pred_region
    _
  $region17: #{encoder_forward.4} parent=0 // pred_fallthru
    _
  // Predicated region
  $region18: #{encoder_forward.4} parent=0 // pred_check
    _
  $region19: #{encoder_forward.4} parent=0 // pred_check_branch
    %434 = sbr.rel (0) target = $region21
  $region20: #{encoder_forward.4} parent=0 // pred_region
    _
  $region21: #{encoder_forward.4} parent=0 // pred_fallthru
    _

// kernel: encoder_forward.5
$region0: #{encoder_forward.5}
  #allocation0 [shape = 'u32[]', space=smem, size = 0x4, offset = 0x4, fixed_abs, tag = 'smem constant byte address 0x4 - core index']
  #allocation1 [shape = 'u32[144,128]{1,0:T(1,128)}', space=vmem, size = 0x12000, scoped, tag = 'internal scratch']
  %s0 = inlined_call_operand.vmem [shape: bf16[32,256], index: 0, kind: input, shape index: {}]
  %s1 = inlined_call_operand.vmem [shape: bf16[256,32], index: 1, kind: input, shape index: {}]
  %s2 = inlined_call_operand.vmem [shape: f32[3,32], index: 2, kind: input, shape index: {}]
  %s3 = inlined_call_operand.vmem [shape: f32[32,32], index: 3, kind: output, shape index: {}]
  %s4 = sld [smem:[#allocation0]]
  $region22: #{encoder_forward.5} parent=0
    _
  %s6 = ssub.s32 1, %s4
  %s7 = scalar_select 0, %s6, %s4
  // Predicated region
  $region2: #{encoder_forward.5} parent=0 // pred_check
    _
  $region3: #{encoder_forward.5} parent=0 // pred_check_branch
    %9 = sbr.rel (0) target = $region5
  $region4: #{encoder_forward.5} parent=0 // pred_region
    _
  $region5: #{encoder_forward.5} parent=0 // pred_fallthru
    _
  // Predicated region
  $region6: #{encoder_forward.5} parent=0 // pred_check
    _
  $region7: #{encoder_forward.5} parent=0 // pred_check_branch
    %11 = sbr.rel (0) target = $region9
  $region8: #{encoder_forward.5} parent=0 // pred_region
    _
  $region9: #{encoder_forward.5} parent=0 // pred_fallthru
    _
  // Predicated region
  $region10: #{encoder_forward.5} parent=0 // pred_check
    _
  $region11: #{encoder_forward.5} parent=0 // pred_check_branch
    %13 = sbr.rel (0) target = $region13
  $region12: #{encoder_forward.5} parent=0 // pred_region
    _
  $region13: #{encoder_forward.5} parent=0 // pred_fallthru
    _
  %v15 = vld [vmem:[%s0] sm:$0xff]
  %v16 = vld [vmem:[%s0 + $0x8] sm:$0xff]
  %v17 = vld [vmem:[%s0 + $0x10] sm:$0xff]
  %v18 = vld [vmem:[%s0 + $0x18] sm:$0xff]
  %v19 = vld [vmem:[%s1] sm:$0xf]
  %v20 = vld [vmem:[%s1 + $0x4] sm:$0xf]
  %v21 = vld [vmem:[%s1 + $0x8] sm:$0xf]
  %v22 = vld [vmem:[%s1 + $0xc] sm:$0xf]
  %v23 = vld [vmem:[%s1 + $0x10] sm:$0xf]
  %v24 = vld [vmem:[%s1 + $0x14] sm:$0xf]
  %v25 = vld [vmem:[%s1 + $0x18] sm:$0xf]
  %v26 = vld [vmem:[%s1 + $0x1c] sm:$0xf]
  %v27 = vld [vmem:[%s1 + $0x20] sm:$0xf]
  %v28 = vld [vmem:[%s1 + $0x24] sm:$0xf]
  %v29 = vld [vmem:[%s1 + $0x28] sm:$0xf]
  %v30 = vld [vmem:[%s1 + $0x2c] sm:$0xf]
  %v31 = vld [vmem:[%s1 + $0x30] sm:$0xf]
  %v32 = vld [vmem:[%s1 + $0x34] sm:$0xf]
  %v33 = vld [vmem:[%s1 + $0x38] sm:$0xf]
  %v34 = vld [vmem:[%s1 + $0x3c] sm:$0xf]
  %v35 = vld [vmem:[%s1 + $0x40] sm:$0xf]
  %v36 = vld [vmem:[%s1 + $0x44] sm:$0xf]
  %v37 = vld [vmem:[%s1 + $0x48] sm:$0xf]
  %v38 = vld [vmem:[%s1 + $0x4c] sm:$0xf]
  %v39 = vld [vmem:[%s1 + $0x50] sm:$0xf]
  %v40 = vld [vmem:[%s1 + $0x54] sm:$0xf]
  %v41 = vld [vmem:[%s1 + $0x58] sm:$0xf]
  %v42 = vld [vmem:[%s1 + $0x5c] sm:$0xf]
  %v43 = vld [vmem:[%s1 + $0x60] sm:$0xf]
  %v44 = vld [vmem:[%s1 + $0x64] sm:$0xf]
  %v45 = vld [vmem:[%s1 + $0x68] sm:$0xf]
  %v46 = vld [vmem:[%s1 + $0x6c] sm:$0xf]
  %v47 = vld [vmem:[%s1 + $0x70] sm:$0xf]
  %v48 = vld [vmem:[%s1 + $0x74] sm:$0xf]
  %v49 = vld [vmem:[%s1 + $0x78] sm:$0xf]
  %v50 = vld [vmem:[%s1 + $0x7c] sm:$0xf]
  %v51 = vld [vmem:[%s2] sm:$0x7]
  %v52 = vlaneseq
  %v53 = vshrl.u32 %v52, 7
  %v54 = vsub.s32 0, %v53
  %v55 = vrot.slane %v51, %v54
  %v60 = vunpack.c.l.b16 %v15
  %v61 = vunpack.c.h.b16 %v15
  %v62 = vunpack.c.l.b16 %v16
  %v63 = vunpack.c.h.b16 %v16
  %v64 = vunpack.c.l.b16 %v17
  %v65 = vunpack.c.h.b16 %v17
  %v66 = vunpack.c.l.b16 %v18
  %v67 = vunpack.c.h.b16 %v18
  %v68 = vpack.c.b16 %v62, %v60
  %v69 = vpack.c.b16 %v63, %v61
  %v70 = vpack.c.b16 %v66, %v64
  %v71 = vpack.c.b16 %v67, %v65
  %v108 = vunpack.c.l.b16 %v19
  %v109 = vunpack.c.l.b16 %v20
  %v110 = vunpack.c.l.b16 %v21
  %v111 = vunpack.c.l.b16 %v22
  %v112 = vunpack.c.l.b16 %v23
  %v113 = vunpack.c.l.b16 %v24
  %v114 = vunpack.c.l.b16 %v25
  %v115 = vunpack.c.l.b16 %v26
  %v116 = vunpack.c.l.b16 %v27
  %v117 = vunpack.c.l.b16 %v28
  %v118 = vunpack.c.l.b16 %v29
  %v119 = vunpack.c.l.b16 %v30
  %v120 = vunpack.c.l.b16 %v31
  %v121 = vunpack.c.l.b16 %v32
  %v122 = vunpack.c.l.b16 %v33
  %v123 = vunpack.c.l.b16 %v34
  %v124 = vunpack.c.l.b16 %v35
  %v125 = vunpack.c.l.b16 %v36
  %v126 = vunpack.c.l.b16 %v37
  %v127 = vunpack.c.l.b16 %v38
  %v128 = vunpack.c.l.b16 %v39
  %v129 = vunpack.c.l.b16 %v40
  %v130 = vunpack.c.l.b16 %v41
  %v131 = vunpack.c.l.b16 %v42
  %v132 = vunpack.c.l.b16 %v43
  %v133 = vunpack.c.l.b16 %v44
  %v134 = vunpack.c.l.b16 %v45
  %v135 = vunpack.c.l.b16 %v46
  %v136 = vunpack.c.l.b16 %v47
  %v137 = vunpack.c.l.b16 %v48
  %v138 = vunpack.c.l.b16 %v49
  %v139 = vunpack.c.l.b16 %v50
  %v140 = vpack.c.b16 %v109, %v108
  %v141 = vpack.c.b16 %v111, %v110
  %v142 = vpack.c.b16 %v113, %v112
  %v143 = vpack.c.b16 %v115, %v114
  %v144 = vpack.c.b16 %v117, %v116
  %v145 = vpack.c.b16 %v119, %v118
  %v146 = vpack.c.b16 %v121, %v120
  %v147 = vpack.c.b16 %v123, %v122
  %v148 = vpack.c.b16 %v125, %v124
  %v149 = vpack.c.b16 %v127, %v126
  %v150 = vpack.c.b16 %v129, %v128
  %v151 = vpack.c.b16 %v131, %v130
  %v152 = vpack.c.b16 %v133, %v132
  %v153 = vpack.c.b16 %v135, %v134
  %v154 = vpack.c.b16 %v137, %v136
  %v155 = vpack.c.b16 %v139, %v138
  %172 = vmatprep.subr.bf16.mxu0 0
  %173 = vmatpush1.bf16.msra.mxu0 %v140
  %174 = vmatprep.subr.bf16.mxu0 0
  %175 = vmatpush1.bf16.msra.mxu0 %v141
  %176 = vmatprep.subr.bf16.mxu0 0
  %177 = vmatpush1.bf16.msra.mxu0 %v142
  %178 = vmatprep.subr.bf16.mxu0 0
  %179 = vmatpush1.bf16.msra.mxu0 %v143
  %180 = vmatprep.subr.bf16.mxu0 0
  %181 = vmatpush1.bf16.msra.mxu0 %v144
  %182 = vmatprep.subr.bf16.mxu0 0
  %183 = vmatpush1.bf16.msra.mxu0 %v145
  %184 = vmatprep.subr.bf16.mxu0 0
  %185 = vmatpush1.bf16.msra.mxu0 %v146
  %186 = vmatprep.subr.bf16.mxu0 0
  %187 = vmatpush1.bf16.msra.mxu0 %v147
  %188 = vmatprep.subr.bf16.mxu0 0
  %189 = vmatpush1.bf16.msra.mxu0 %v148
  %190 = vmatprep.subr.bf16.mxu0 0
  %191 = vmatpush1.bf16.msra.mxu0 %v149
  %192 = vmatprep.subr.bf16.mxu0 0
  %193 = vmatpush1.bf16.msra.mxu0 %v150
  %194 = vmatprep.subr.bf16.mxu0 0
  %195 = vmatpush1.bf16.msra.mxu0 %v151
  %196 = vmatprep.subr.bf16.mxu0 0
  %197 = vmatpush1.bf16.msra.mxu0 %v152
  %198 = vmatprep.subr.bf16.mxu0 0
  %199 = vmatpush1.bf16.msra.mxu0 %v153
  %200 = vmatprep.subr.bf16.mxu0 0
  %201 = vmatpush1.bf16.msra.mxu0 %v154
  %202 = vmatprep.subr.bf16.mxu0 0
  %203 = vmatpush1.bf16.msra.mxu0 %v155
  %204 = vmatprep.mubr.bf16.mxu0 %v69
  %205 = vmatmul.mubr.bf16.gmra.mrb[0].mxu0 %v68
  %v206 = vpop.f32.mrb[0].mxu0
  %v207 = vadd.f32 %v55, %v206
  %v208 = vpop.f32.mrb[0].mxu0
  %v209 = vpop.f32.mrb[0].mxu0
  %v210 = vadd.f32 %v55, %v209
  %v211 = vpop.f32.mrb[0].mxu0
  %212 = vmatprep.mubr.bf16.mxu0 %v71
  %213 = vmatmul.mubr.bf16.gmra.mrb[0].mxu0 %v70
  %v214 = vpop.f32.mrb[0].mxu0
  %v215 = vadd.f32 %v55, %v214
  %v216 = vpop.f32.mrb[0].mxu0
  %v217 = vpop.f32.mrb[0].mxu0
  %v218 = vadd.f32 %v55, %v217
  %v219 = vpop.f32.mrb[0].mxu0
  %220 = vdwg.mxu0
  %vm221 = vcmask 261120
  %v222 = vsel %vm221, %v207, 0.0
  %v223 = vsel %vm221, %v210, 0.0
  %v224 = vadd.f32 %v222, %v223
  %v225 = vsel %vm221, %v215, 0.0
  %v226 = vadd.f32 %v224, %v225
  %v227 = vsel %vm221, %v218, 0.0
  %v228 = vadd.f32 %v226, %v227
  %v229 = vrot.slane %v228, 4
  %v230 = vadd.f32 %v228, %v229
  %v231 = vrot.slane %v230, 2
  %v232 = vadd.f32 %v230, %v231
  %v233 = vrot.slane %v232, 1
  %v234 = vadd.f32 %v232, %v233
  %v235 = vmul.f32 %v234, 0.03125
  %v236 = vmul.f32 %v207, %v207
  %v237 = vmul.f32 %v210, %v210
  %v238 = vmul.f32 %v215, %v215
  %v239 = vmul.f32 %v218, %v218
  %v240 = vsel %vm221, %v236, 0.0
  %v241 = vsel %vm221, %v237, 0.0
  %v242 = vadd.f32 %v240, %v241
  %v243 = vsel %vm221, %v238, 0.0
  %v244 = vadd.f32 %v242, %v243
  %v245 = vsel %vm221, %v239, 0.0
  %v246 = vadd.f32 %v244, %v245
  %v247 = vrot.slane %v246, 4
  %v248 = vadd.f32 %v246, %v247
  %v249 = vrot.slane %v248, 2
  %v250 = vadd.f32 %v248, %v249
  %v251 = vrot.slane %v250, 1
  %v252 = vadd.f32 %v250, %v251
  %v253 = vmul.f32 %v252, 0.03125
  %v254 = vmul.f32 %v235, %v235
  %v255 = vsub.f32 %v253, %v254
  %v256 = vsub.f32 %v207, %v235
  %v257 = vsub.f32 %v210, %v235
  %v258 = vsub.f32 %v215, %v235
  %v259 = vsub.f32 %v218, %v235
  %v260 = vadd.f32 %v255, 1e-05
  %v261 = vrsqrt.pop %v260
  %v262 = vmul.f32 %v256, %v261
  %v263 = vmul.f32 %v257, %v261
  %v264 = vmul.f32 %v258, %v261
  %v265 = vmul.f32 %v259, %v261
  %v266 = vlaneseq
  %v267 = vshrl.u32 %v266, 7
  %v268 = vsub.s32 1, %v267
  %v269 = vrot.slane %v51, %v268
  %v270 = vmul.f32 %v262, %v269
  %v271 = vmul.f32 %v263, %v269
  %v272 = vmul.f32 %v264, %v269
  %v273 = vmul.f32 %v265, %v269
  %v274 = vlaneseq
  %v275 = vshrl.u32 %v274, 7
  %v276 = vsub.s32 2, %v275
  %v277 = vrot.slane %v51, %v276
  %v278 = vadd.f32 %v270, %v277
  %v279 = vadd.f32 %v271, %v277
  %v280 = vadd.f32 %v272, %v277
  %v281 = vadd.f32 %v273, %v277
  %282 = vst.msk [vmem:[%s3] sm:$0xff] %vm221, %v278
  %283 = vst.msk [vmem:[%s3 + $0x8] sm:$0xff] %vm221, %v279
  %284 = vst.msk [vmem:[%s3 + $0x10] sm:$0xff] %vm221, %v280
  %285 = vst.msk [vmem:[%s3 + $0x18] sm:$0xff] %vm221, %v281
  // Predicated region
  $region14: #{encoder_forward.5} parent=0 // pred_check
    _
  $region15: #{encoder_forward.5} parent=0 // pred_check_branch
    %287 = sbr.rel (0) target = $region17
  $region16: #{encoder_forward.5} parent=0 // pred_region
    _
  $region17: #{encoder_forward.5} parent=0 // pred_fallthru
    _
  // Predicated region
  $region18: #{encoder_forward.5} parent=0 // pred_check
    _
  $region19: #{encoder_forward.5} parent=0 // pred_check_branch
    %289 = sbr.rel (0) target = $region21
  $region20: #{encoder_forward.5} parent=0 // pred_region
    _
  $region21: #{encoder_forward.5} parent=0 // pred_fallthru
    _

// kernel: encoder_forward.6
$region0: #{encoder_forward.6}
  #allocation0 [shape = 'u32[]', space=smem, size = 0x4, offset = 0x4, fixed_abs, tag = 'smem constant byte address 0x4 - core index']
  #allocation1 [shape = 'u32[144,128]{1,0:T(1,128)}', space=vmem, size = 0x12000, scoped, tag = 'internal scratch']
  %s0 = inlined_call_operand.vmem [shape: bf16[32,288], index: 0, kind: input, shape index: {}]
  %s1 = inlined_call_operand.vmem [shape: bf16[288,16], index: 1, kind: input, shape index: {}]
  %s2 = inlined_call_operand.vmem [shape: f32[2,16], index: 2, kind: input, shape index: {}]
  %s3 = inlined_call_operand.vmem [shape: bf16[16,32], index: 3, kind: input, shape index: {}]
  %s4 = inlined_call_operand.vmem [shape: f32[2,32], index: 4, kind: input, shape index: {}]
  %s5 = inlined_call_operand.vmem [shape: f32[32,32], index: 5, kind: input, shape index: {}]
  %s6 = inlined_call_operand.vmem [shape: f32[32,32], index: 6, kind: output, shape index: {}]
  %s7 = sld [smem:[#allocation0]]
  $region34: #{encoder_forward.6} parent=0
    _
  %s9 = ssub.s32 1, %s7
  %s10 = scalar_select 0, %s9, %s7
  // Predicated region
  $region2: #{encoder_forward.6} parent=0 // pred_check
    _
  $region3: #{encoder_forward.6} parent=0 // pred_check_branch
    %12 = sbr.rel (0) target = $region5
  $region4: #{encoder_forward.6} parent=0 // pred_region
    _
  $region5: #{encoder_forward.6} parent=0 // pred_fallthru
    _
  // Predicated region
  $region6: #{encoder_forward.6} parent=0 // pred_check
    _
  $region7: #{encoder_forward.6} parent=0 // pred_check_branch
    %14 = sbr.rel (0) target = $region9
  $region8: #{encoder_forward.6} parent=0 // pred_region
    _
  $region9: #{encoder_forward.6} parent=0 // pred_fallthru
    _
  // Predicated region
  $region10: #{encoder_forward.6} parent=0 // pred_check
    _
  $region11: #{encoder_forward.6} parent=0 // pred_check_branch
    %16 = sbr.rel (0) target = $region13
  $region12: #{encoder_forward.6} parent=0 // pred_region
    _
  $region13: #{encoder_forward.6} parent=0 // pred_fallthru
    _
  // Predicated region
  $region14: #{encoder_forward.6} parent=0 // pred_check
    _
  $region15: #{encoder_forward.6} parent=0 // pred_check_branch
    %18 = sbr.rel (0) target = $region17
  $region16: #{encoder_forward.6} parent=0 // pred_region
    _
  $region17: #{encoder_forward.6} parent=0 // pred_fallthru
    _
  // Predicated region
  $region18: #{encoder_forward.6} parent=0 // pred_check
    _
  $region19: #{encoder_forward.6} parent=0 // pred_check_branch
    %20 = sbr.rel (0) target = $region21
  $region20: #{encoder_forward.6} parent=0 // pred_region
    _
  $region21: #{encoder_forward.6} parent=0 // pred_fallthru
    _
  // Predicated region
  $region22: #{encoder_forward.6} parent=0 // pred_check
    _
  $region23: #{encoder_forward.6} parent=0 // pred_check_branch
    %22 = sbr.rel (0) target = $region25
  $region24: #{encoder_forward.6} parent=0 // pred_region
    _
  $region25: #{encoder_forward.6} parent=0 // pred_fallthru
    _
  %v24 = vld [vmem:[%s0] sm:$0xff]
  %v25 = vld [vmem:[%s0 + $0x8] sm:$0xf]
  %v26 = vld [vmem:[%s0 + $0xc] sm:$0xff]
  %v27 = vld [vmem:[%s0 + $0x14] sm:$0xf]
  %v28 = vld [vmem:[%s0 + $0x18] sm:$0xff]
  %v29 = vld [vmem:[%s0 + $0x20] sm:$0xf]
  %v30 = vld [vmem:[%s0 + $0x24] sm:$0xff]
  %v31 = vld [vmem:[%s0 + $0x2c] sm:$0xf]
  %v32 = vld [vmem:[%s1] sm:$0xf]
  %v33 = vld [vmem:[%s1 + $0x4] sm:$0xf]
  %v34 = vld [vmem:[%s1 + $0x8] sm:$0xf]
  %v35 = vld [vmem:[%s1 + $0xc] sm:$0xf]
  %v36 = vld [vmem:[%s1 + $0x10] sm:$0xf]
  %v37 = vld [vmem:[%s1 + $0x14] sm:$0xf]
  %v38 = vld [vmem:[%s1 + $0x18] sm:$0xf]
  %v39 = vld [vmem:[%s1 + $0x1c] sm:$0xf]
  %v40 = vld [vmem:[%s1 + $0x20] sm:$0xf]
  %v41 = vld [vmem:[%s1 + $0x24] sm:$0xf]
  %v42 = vld [vmem:[%s1 + $0x28] sm:$0xf]
  %v43 = vld [vmem:[%s1 + $0x2c] sm:$0xf]
  %v44 = vld [vmem:[%s1 + $0x30] sm:$0xf]
  %v45 = vld [vmem:[%s1 + $0x34] sm:$0xf]
  %v46 = vld [vmem:[%s1 + $0x38] sm:$0xf]
  %v47 = vld [vmem:[%s1 + $0x3c] sm:$0xf]
  %v48 = vld [vmem:[%s1 + $0x40] sm:$0xf]
  %v49 = vld [vmem:[%s1 + $0x44] sm:$0xf]
  %v50 = vld [vmem:[%s1 + $0x48] sm:$0xf]
  %v51 = vld [vmem:[%s1 + $0x4c] sm:$0xf]
  %v52 = vld [vmem:[%s1 + $0x50] sm:$0xf]
  %v53 = vld [vmem:[%s1 + $0x54] sm:$0xf]
  %v54 = vld [vmem:[%s1 + $0x58] sm:$0xf]
  %v55 = vld [vmem:[%s1 + $0x5c] sm:$0xf]
  %v56 = vld [vmem:[%s1 + $0x60] sm:$0xf]
  %v57 = vld [vmem:[%s1 + $0x64] sm:$0xf]
  %v58 = vld [vmem:[%s1 + $0x68] sm:$0xf]
  %v59 = vld [vmem:[%s1 + $0x6c] sm:$0xf]
  %v60 = vld [vmem:[%s1 + $0x70] sm:$0xf]
  %v61 = vld [vmem:[%s1 + $0x74] sm:$0xf]
  %v62 = vld [vmem:[%s1 + $0x78] sm:$0xf]
  %v63 = vld [vmem:[%s1 + $0x7c] sm:$0xf]
  %v64 = vld [vmem:[%s1 + $0x80] sm:$0xf]
  %v65 = vld [vmem:[%s1 + $0x84] sm:$0xf]
  %v66 = vld [vmem:[%s1 + $0x88] sm:$0xf]
  %v67 = vld [vmem:[%s1 + $0x8c] sm:$0xf]
  %v76 = vunpack.c.l.b16 %v24
  %v77 = vunpack.c.h.b16 %v24
  %v78 = vunpack.c.l.b16 %v25
  %v79 = vunpack.c.l.b16 %v26
  %v80 = vunpack.c.h.b16 %v26
  %v81 = vunpack.c.l.b16 %v27
  %v82 = vunpack.c.l.b16 %v28
  %v83 = vunpack.c.h.b16 %v28
  %v84 = vunpack.c.l.b16 %v29
  %v85 = vunpack.c.l.b16 %v30
  %v86 = vunpack.c.h.b16 %v30
  %v87 = vunpack.c.l.b16 %v31
  %v88 = vpack.c.b16 %v79, %v76
  %v89 = vpack.c.b16 %v80, %v77
  %v90 = vpack.c.b16 %v81, %v78
  %v91 = vpack.c.b16 %v85, %v82
  %v92 = vpack.c.b16 %v86, %v83
  %v93 = vpack.c.b16 %v87, %v84
  %v134 = vunpack.c.l.b16 %v32
  %v135 = vunpack.c.l.b16 %v33
  %v136 = vunpack.c.l.b16 %v34
  %v137 = vunpack.c.l.b16 %v35
  %v138 = vunpack.c.l.b16 %v36
  %v139 = vunpack.c.l.b16 %v37
  %v140 = vunpack.c.l.b16 %v38
  %v141 = vunpack.c.l.b16 %v39
  %v142 = vunpack.c.l.b16 %v40
  %v143 = vunpack.c.l.b16 %v41
  %v144 = vunpack.c.l.b16 %v42
  %v145 = vunpack.c.l.b16 %v43
  %v146 = vunpack.c.l.b16 %v44
  %v147 = vunpack.c.l.b16 %v45
  %v148 = vunpack.c.l.b16 %v46
  %v149 = vunpack.c.l.b16 %v47
  %v150 = vunpack.c.l.b16 %v48
  %v151 = vunpack.c.l.b16 %v49
  %v152 = vunpack.c.l.b16 %v50
  %v153 = vunpack.c.l.b16 %v51
  %v154 = vunpack.c.l.b16 %v52
  %v155 = vunpack.c.l.b16 %v53
  %v156 = vunpack.c.l.b16 %v54
  %v157 = vunpack.c.l.b16 %v55
  %v158 = vunpack.c.l.b16 %v56
  %v159 = vunpack.c.l.b16 %v57
  %v160 = vunpack.c.l.b16 %v58
  %v161 = vunpack.c.l.b16 %v59
  %v162 = vunpack.c.l.b16 %v60
  %v163 = vunpack.c.l.b16 %v61
  %v164 = vunpack.c.l.b16 %v62
  %v165 = vunpack.c.l.b16 %v63
  %v166 = vunpack.c.l.b16 %v64
  %v167 = vunpack.c.l.b16 %v65
  %v168 = vunpack.c.l.b16 %v66
  %v169 = vunpack.c.l.b16 %v67
  %v170 = vpack.c.b16 %v135, %v134
  %v171 = vpack.c.b16 %v137, %v136
  %v172 = vpack.c.b16 %v139, %v138
  %v173 = vpack.c.b16 %v141, %v140
  %v174 = vpack.c.b16 %v143, %v142
  %v175 = vpack.c.b16 %v145, %v144
  %v176 = vpack.c.b16 %v147, %v146
  %v177 = vpack.c.b16 %v149, %v148
  %v178 = vpack.c.b16 %v151, %v150
  %v179 = vpack.c.b16 %v153, %v152
  %v180 = vpack.c.b16 %v155, %v154
  %v181 = vpack.c.b16 %v157, %v156
  %v182 = vpack.c.b16 %v159, %v158
  %v183 = vpack.c.b16 %v161, %v160
  %v184 = vpack.c.b16 %v163, %v162
  %v185 = vpack.c.b16 %v165, %v164
  %v186 = vpack.c.b16 %v167, %v166
  %v187 = vpack.c.b16 %v169, %v168
  %vm206 = vcmask 261120
  %v208 = vsel %vm206, %v90, 0
  %v211 = vsel %vm206, %v93, 0
  %213 = vmatprep.subr.bf16.mxu0 0
  %214 = vmatpush1.bf16.msra.mxu0 %v170
  %215 = vmatprep.subr.bf16.mxu0 0
  %216 = vmatpush1.bf16.msra.mxu0 %v171
  %217 = vmatprep.subr.bf16.mxu0 0
  %218 = vmatpush1.bf16.msra.mxu0 %v172
  %219 = vmatprep.subr.bf16.mxu0 0
  %220 = vmatpush1.bf16.msra.mxu0 %v173
  %221 = vmatprep.subr.bf16.mxu0 0
  %222 = vmatpush1.bf16.msra.mxu0 %v174
  %223 = vmatprep.subr.bf16.mxu0 0
  %224 = vmatpush1.bf16.msra.mxu0 %v175
  %225 = vmatprep.subr.bf16.mxu0 0
  %226 = vmatpush1.bf16.msra.mxu0 %v176
  %227 = vmatprep.subr.bf16.mxu0 0
  %228 = vmatpush1.bf16.msra.mxu0 %v177
  %229 = vmatprep.subr.bf16.mxu0 0
  %230 = vmatpush1.bf16.msra.mxu0 %v178
  %231 = vmatprep.subr.bf16.mxu0 0
  %232 = vmatpush1.bf16.msra.mxu0 %v179
  %233 = vmatprep.subr.bf16.mxu0 0
  %234 = vmatpush1.bf16.msra.mxu0 %v180
  %235 = vmatprep.subr.bf16.mxu0 0
  %236 = vmatpush1.bf16.msra.mxu0 %v181
  %237 = vmatprep.subr.bf16.mxu0 0
  %238 = vmatpush1.bf16.msra.mxu0 %v182
  %239 = vmatprep.subr.bf16.mxu0 0
  %240 = vmatpush1.bf16.msra.mxu0 %v183
  %241 = vmatprep.subr.bf16.mxu0 0
  %242 = vmatpush1.bf16.msra.mxu0 %v184
  %243 = vmatprep.subr.bf16.mxu0 0
  %244 = vmatpush1.bf16.msra.mxu0 %v185
  %245 = vmatprep.mubr.bf16.mxu0 %v89
  %246 = vmatmul.mubr.bf16.gmra.mrb[0].mxu0 %v88
  %v247 = vpop.f32.mrb[0].mxu0
  %v248 = vadd.f32 0.0, %v247
  %v249 = vpop.f32.mrb[0].mxu0
  %v250 = vpop.f32.mrb[0].mxu0
  %v251 = vadd.f32 0.0, %v250
  %v252 = vpop.f32.mrb[0].mxu0
  %253 = vmatprep.mubr.bf16.mxu0 %v92
  %254 = vmatmul.mubr.bf16.gmra.mrb[0].mxu0 %v91
  %v255 = vpop.f32.mrb[0].mxu0
  %v256 = vadd.f32 0.0, %v255
  %v257 = vpop.f32.mrb[0].mxu0
  %v258 = vpop.f32.mrb[0].mxu0
  %v259 = vadd.f32 0.0, %v258
  %v260 = vpop.f32.mrb[0].mxu0
  %261 = vdwg.mxu0
  %262 = vmatprep.subr.bf16.mxu0 0
  %263 = vmatpush1.bf16.msra.mxu0 %v186
  %264 = vmatprep.subr.bf16.mxu0 0
  %265 = vmatpush1.bf16.msra.mxu0 %v187
  %266 = vmatprep.subr.bf16.mxu0 0
  %267 = vmatpush1.bf16.msra.mxu0 0
  %268 = vmatprep.subr.bf16.mxu0 0
  %269 = vmatpush1.bf16.msra.mxu0 0
  %270 = vmatprep.subr.bf16.mxu0 0
  %271 = vmatpush1.bf16.msra.mxu0 0
  %272 = vmatprep.subr.bf16.mxu0 0
  %273 = vmatpush1.bf16.msra.mxu0 0
  %274 = vmatprep.subr.bf16.mxu0 0
  %275 = vmatpush1.bf16.msra.mxu0 0
  %276 = vmatprep.subr.bf16.mxu0 0
  %277 = vmatpush1.bf16.msra.mxu0 0
  %278 = vmatprep.subr.bf16.mxu0 0
  %279 = vmatpush1.bf16.msra.mxu0 0
  %280 = vmatprep.subr.bf16.mxu0 0
  %281 = vmatpush1.bf16.msra.mxu0 0
  %282 = vmatprep.subr.bf16.mxu0 0
  %283 = vmatpush1.bf16.msra.mxu0 0
  %284 = vmatprep.subr.bf16.mxu0 0
  %285 = vmatpush1.bf16.msra.mxu0 0
  %286 = vmatprep.subr.bf16.mxu0 0
  %287 = vmatpush1.bf16.msra.mxu0 0
  %288 = vmatprep.subr.bf16.mxu0 0
  %289 = vmatpush1.bf16.msra.mxu0 0
  %290 = vmatprep.subr.bf16.mxu0 0
  %291 = vmatpush1.bf16.msra.mxu0 0
  %292 = vmatprep.subr.bf16.mxu0 0
  %293 = vmatpush1.bf16.msra.mxu0 0
  %294 = vmatprep.mubr.bf16.mxu0 0
  %295 = vmatmul.mubr.bf16.gmra.mrb[0].mxu0 %v208
  %v296 = vpop.f32.mrb[0].mxu0
  %v297 = vadd.f32 %v248, %v296
  %v298 = vpop.f32.mrb[0].mxu0
  %v299 = vpop.f32.mrb[0].mxu0
  %v300 = vadd.f32 %v251, %v299
  %v301 = vpop.f32.mrb[0].mxu0
  %302 = vmatprep.mubr.bf16.mxu0 0
  %303 = vmatmul.mubr.bf16.gmra.mrb[0].mxu0 %v211
  %v304 = vpop.f32.mrb[0].mxu0
  %v305 = vadd.f32 %v256, %v304
  %v306 = vpop.f32.mrb[0].mxu0
  %v307 = vpop.f32.mrb[0].mxu0
  %v308 = vadd.f32 %v259, %v307
  %v309 = vpop.f32.mrb[0].mxu0
  %310 = vdwg.mxu0
  %v311 = vld [vmem:[%s2] sm:$0x3]
  %vm312 = vcmask 130048
  %v313 = vsel %vm312, %v297, 0.0
  %v314 = vsel %vm312, %v300, 0.0
  %v315 = vadd.f32 %v313, %v314
  %v316 = vsel %vm312, %v305, 0.0
  %v317 = vadd.f32 %v315, %v316
  %v318 = vsel %vm312, %v308, 0.0
  %v319 = vadd.f32 %v317, %v318
  %v320 = vrot.slane %v319, 4
  %v321 = vadd.f32 %v319, %v320
  %v322 = vrot.slane %v321, 2
  %v323 = vadd.f32 %v321, %v322
  %v324 = vrot.slane %v323, 1
  %v325 = vadd.f32 %v323, %v324
  %v326 = vmul.f32 %v325, 0.03125
  %v327 = vmul.f32 %v297, %v297
  %v328 = vmul.f32 %v300, %v300
  %v329 = vmul.f32 %v305, %v305
  %v330 = vmul.f32 %v308, %v308
  %v331 = vsel %vm312, %v327, 0.0
  %v332 = vsel %vm312, %v328, 0.0
  %v333 = vadd.f32 %v331, %v332
  %v334 = vsel %vm312, %v329, 0.0
  %v335 = vadd.f32 %v333, %v334
  %v336 = vsel %vm312, %v330, 0.0
  %v337 = vadd.f32 %v335, %v336
  %v338 = vrot.slane %v337, 4
  %v339 = vadd.f32 %v337, %v338
  %v340 = vrot.slane %v339, 2
  %v341 = vadd.f32 %v339, %v340
  %v342 = vrot.slane %v341, 1
  %v343 = vadd.f32 %v341, %v342
  %v344 = vmul.f32 %v343, 0.03125
  %v345 = vmul.f32 %v326, %v326
  %v346 = vsub.f32 %v344, %v345
  %v347 = vsub.f32 %v297, %v326
  %v348 = vsub.f32 %v300, %v326
  %v349 = vsub.f32 %v305, %v326
  %v350 = vsub.f32 %v308, %v326
  %v351 = vadd.f32 %v346, 1e-05
  %v352 = vrsqrt.pop %v351
  %v353 = vmul.f32 %v347, %v352
  %v354 = vmul.f32 %v348, %v352
  %v355 = vmul.f32 %v349, %v352
  %v356 = vmul.f32 %v350, %v352
  %v357 = vlaneseq
  %v358 = vshrl.u32 %v357, 7
  %v359 = vsub.s32 0, %v358
  %v360 = vrot.slane %v311, %v359
  %v361 = vmul.f32 %v353, %v360
  %v362 = vmul.f32 %v354, %v360
  %v363 = vmul.f32 %v355, %v360
  %v364 = vmul.f32 %v356, %v360
  %v365 = vlaneseq
  %v366 = vshrl.u32 %v365, 7
  %v367 = vsub.s32 1, %v366
  %v368 = vrot.slane %v311, %v367
  %v369 = vadd.f32 %v361, %v368
  %v370 = vadd.f32 %v362, %v368
  %v371 = vadd.f32 %v363, %v368
  %v372 = vadd.f32 %v364, %v368
  %v373 = vmax.f32 %v369, 0.0
  %v374 = vmax.f32 %v370, 0.0
  %v375 = vmax.f32 %v371, 0.0
  %v376 = vmax.f32 %v372, 0.0
  %v377 = vpack.c.bf16 %v374, %v373
  %v378 = vpack.c.bf16 %v376, %v375
  %v379 = vld [vmem:[%s3] sm:$0xf]
  %v380 = vld [vmem:[%s3 + $0x4] sm:$0xf]
  %v383 = vunpack.c.l.b16 %v379
  %v384 = vunpack.c.l.b16 %v380
  %v385 = vpack.c.b16 %v384, %v383
  %v388 = vsel %vm312, %v377, 0
  %v391 = vsel %vm312, %v378, 0
  %393 = vmatprep.subr.bf16.mxu0 0
  %394 = vmatpush1.bf16.msra.mxu0 %v385
  %395 = vmatprep.subr.bf16.mxu0 0
  %396 = vmatpush1.bf16.msra.mxu0 0
  %397 = vmatprep.subr.bf16.mxu0 0
  %398 = vmatpush1.bf16.msra.mxu0 0
  %399 = vmatprep.subr.bf16.mxu0 0
  %400 = vmatpush1.bf16.msra.mxu0 0
  %401 = vmatprep.subr.bf16.mxu0 0
  %402 = vmatpush1.bf16.msra.mxu0 0
  %403 = vmatprep.subr.bf16.mxu0 0
  %404 = vmatpush1.bf16.msra.mxu0 0
  %405 = vmatprep.subr.bf16.mxu0 0
  %406 = vmatpush1.bf16.msra.mxu0 0
  %407 = vmatprep.subr.bf16.mxu0 0
  %408 = vmatpush1.bf16.msra.mxu0 0
  %409 = vmatprep.subr.bf16.mxu0 0
  %410 = vmatpush1.bf16.msra.mxu0 0
  %411 = vmatprep.subr.bf16.mxu0 0
  %412 = vmatpush1.bf16.msra.mxu0 0
  %413 = vmatprep.subr.bf16.mxu0 0
  %414 = vmatpush1.bf16.msra.mxu0 0
  %415 = vmatprep.subr.bf16.mxu0 0
  %416 = vmatpush1.bf16.msra.mxu0 0
  %417 = vmatprep.subr.bf16.mxu0 0
  %418 = vmatpush1.bf16.msra.mxu0 0
  %419 = vmatprep.subr.bf16.mxu0 0
  %420 = vmatpush1.bf16.msra.mxu0 0
  %421 = vmatprep.subr.bf16.mxu0 0
  %422 = vmatpush1.bf16.msra.mxu0 0
  %423 = vmatprep.subr.bf16.mxu0 0
  %424 = vmatpush1.bf16.msra.mxu0 0
  %425 = vmatprep.mubr.bf16.mxu0 0
  %426 = vmatmul.mubr.bf16.gmra.mrb[0].mxu0 %v388
  %v427 = vpop.f32.mrb[0].mxu0
  %v428 = vadd.f32 0.0, %v427
  %v429 = vpop.f32.mrb[0].mxu0
  %v430 = vpop.f32.mrb[0].mxu0
  %v431 = vadd.f32 0.0, %v430
  %v432 = vpop.f32.mrb[0].mxu0
  %433 = vmatprep.mubr.bf16.mxu0 0
  %434 = vmatmul.mubr.bf16.gmra.mrb[0].mxu0 %v391
  %v435 = vpop.f32.mrb[0].mxu0
  %v436 = vadd.f32 0.0, %v435
  %v437 = vpop.f32.mrb[0].mxu0
  %v438 = vpop.f32.mrb[0].mxu0
  %v439 = vadd.f32 0.0, %v438
  %v440 = vpop.f32.mrb[0].mxu0
  %441 = vdwg.mxu0
  %v442 = vld [vmem:[%s4] sm:$0x3]
  %v443 = vsel %vm206, %v428, 0.0
  %v444 = vsel %vm206, %v431, 0.0
  %v445 = vadd.f32 %v443, %v444
  %v446 = vsel %vm206, %v436, 0.0
  %v447 = vadd.f32 %v445, %v446
  %v448 = vsel %vm206, %v439, 0.0
  %v449 = vadd.f32 %v447, %v448
  %v450 = vrot.slane %v449, 4
  %v451 = vadd.f32 %v449, %v450
  %v452 = vrot.slane %v451, 2
  %v453 = vadd.f32 %v451, %v452
  %v454 = vrot.slane %v453, 1
  %v455 = vadd.f32 %v453, %v454
  %v456 = vmul.f32 %v455, 0.03125
  %v457 = vmul.f32 %v428, %v428
  %v458 = vmul.f32 %v431, %v431
  %v459 = vmul.f32 %v436, %v436
  %v460 = vmul.f32 %v439, %v439
  %v461 = vsel %vm206, %v457, 0.0
  %v462 = vsel %vm206, %v458, 0.0
  %v463 = vadd.f32 %v461, %v462
  %v464 = vsel %vm206, %v459, 0.0
  %v465 = vadd.f32 %v463, %v464
  %v466 = vsel %vm206, %v460, 0.0
  %v467 = vadd.f32 %v465, %v466
  %v468 = vrot.slane %v467, 4
  %v469 = vadd.f32 %v467, %v468
  %v470 = vrot.slane %v469, 2
  %v471 = vadd.f32 %v469, %v470
  %v472 = vrot.slane %v471, 1
  %v473 = vadd.f32 %v471, %v472
  %v474 = vmul.f32 %v473, 0.03125
  %v475 = vmul.f32 %v456, %v456
  %v476 = vsub.f32 %v474, %v475
  %v477 = vsub.f32 %v428, %v456
  %v478 = vsub.f32 %v431, %v456
  %v479 = vsub.f32 %v436, %v456
  %v480 = vsub.f32 %v439, %v456
  %v481 = vadd.f32 %v476, 1e-05
  %v482 = vrsqrt.pop %v481
  %v483 = vmul.f32 %v477, %v482
  %v484 = vmul.f32 %v478, %v482
  %v485 = vmul.f32 %v479, %v482
  %v486 = vmul.f32 %v480, %v482
  %v487 = vlaneseq
  %v488 = vshrl.u32 %v487, 7
  %v489 = vsub.s32 0, %v488
  %v490 = vrot.slane %v442, %v489
  %v491 = vmul.f32 %v483, %v490
  %v492 = vmul.f32 %v484, %v490
  %v493 = vmul.f32 %v485, %v490
  %v494 = vmul.f32 %v486, %v490
  %v495 = vlaneseq
  %v496 = vshrl.u32 %v495, 7
  %v497 = vsub.s32 1, %v496
  %v498 = vrot.slane %v442, %v497
  %v499 = vadd.f32 %v491, %v498
  %v500 = vadd.f32 %v492, %v498
  %v501 = vadd.f32 %v493, %v498
  %v502 = vadd.f32 %v494, %v498
  %v503 = vld [vmem:[%s5] sm:$0xff]
  %v504 = vld [vmem:[%s5 + $0x8] sm:$0xff]
  %v505 = vld [vmem:[%s5 + $0x10] sm:$0xff]
  %v506 = vld [vmem:[%s5 + $0x18] sm:$0xff]
  %v507 = vadd.f32 %v499, %v503
  %v508 = vadd.f32 %v500, %v504
  %v509 = vadd.f32 %v501, %v505
  %v510 = vadd.f32 %v502, %v506
  %511 = vst.msk [vmem:[%s6] sm:$0xff] %vm206, %v507
  %512 = vst.msk [vmem:[%s6 + $0x8] sm:$0xff] %vm206, %v508
  %513 = vst.msk [vmem:[%s6 + $0x10] sm:$0xff] %vm206, %v509
  %514 = vst.msk [vmem:[%s6 + $0x18] sm:$0xff] %vm206, %v510
  // Predicated region
  $region26: #{encoder_forward.6} parent=0 // pred_check
    _
  $region27: #{encoder_forward.6} parent=0 // pred_check_branch
    %516 = sbr.rel (0) target = $region29
  $region28: #{encoder_forward.6} parent=0 // pred_region
    _
  $region29: #{encoder_forward.6} parent=0 // pred_fallthru
    _
  // Predicated region
  $region30: #{encoder_forward.6} parent=0 // pred_check
    _
  $region31: #{encoder_forward.6} parent=0 // pred_check_branch
    %518 = sbr.rel (0) target = $region33
  $region32: #{encoder_forward.6} parent=0 // pred_region
    _
  $region33: #{encoder_forward.6} parent=0 // pred_fallthru
    _

// kernel: encoder_forward.7
$region0: #{encoder_forward.7}
  #allocation0 [shape = 'u32[]', space=smem, size = 0x4, offset = 0x4, fixed_abs, tag = 'smem constant byte address 0x4 - core index']
  #allocation1 [shape = 'u32[144,128]{1,0:T(1,128)}', space=vmem, size = 0x12000, scoped, tag = 'internal scratch']
  %s0 = inlined_call_operand.vmem [shape: bf16[32,288], index: 0, kind: input, shape index: {}]
  %s1 = inlined_call_operand.vmem [shape: bf16[288,16], index: 1, kind: input, shape index: {}]
  %s2 = inlined_call_operand.vmem [shape: f32[2,16], index: 2, kind: input, shape index: {}]
  %s3 = inlined_call_operand.vmem [shape: bf16[16,32], index: 3, kind: input, shape index: {}]
  %s4 = inlined_call_operand.vmem [shape: f32[2,32], index: 4, kind: input, shape index: {}]
  %s5 = inlined_call_operand.vmem [shape: f32[32,32], index: 5, kind: input, shape index: {}]
  %s6 = inlined_call_operand.hbm [shape: f32[32,32], index: 6, kind: output, shape index: {}]
  %s7 = sld [smem:[#allocation0]]
  $region34: #{encoder_forward.7} parent=0
    _
  %s9 = ssub.s32 1, %s7
  %s10 = scalar_select 0, %s9, %s7
  $region1: #{encoder_forward.7} parent=0
    #allocation2 [shape = 'u8[16384]{0}', space=vmem, size = 0x4000, scoped, tag = 'output window, operand 0, single buffered']
    #allocation3 [shape = 's32[1]{0}', space=sflag, size = 0x4, scoped, tag = 'scoped memory for encoder_forward.7']
    %11 = vsyncpa [#allocation3], 0
    // Predicated region
    $region2: #{encoder_forward.7} parent=1 // pred_check
      _
    $region3: #{encoder_forward.7} parent=1 // pred_check_branch
      %13 = sbr.rel (0) target = $region5
    $region4: #{encoder_forward.7} parent=1 // pred_region
      _
    $region5: #{encoder_forward.7} parent=1 // pred_fallthru
      _
    // Predicated region
    $region6: #{encoder_forward.7} parent=1 // pred_check
      _
    $region7: #{encoder_forward.7} parent=1 // pred_check_branch
      %15 = sbr.rel (0) target = $region9
    $region8: #{encoder_forward.7} parent=1 // pred_region
      _
    $region9: #{encoder_forward.7} parent=1 // pred_fallthru
      _
    // Predicated region
    $region10: #{encoder_forward.7} parent=1 // pred_check
      _
    $region11: #{encoder_forward.7} parent=1 // pred_check_branch
      %17 = sbr.rel (0) target = $region13
    $region12: #{encoder_forward.7} parent=1 // pred_region
      _
    $region13: #{encoder_forward.7} parent=1 // pred_fallthru
      _
    // Predicated region
    $region14: #{encoder_forward.7} parent=1 // pred_check
      _
    $region15: #{encoder_forward.7} parent=1 // pred_check_branch
      %19 = sbr.rel (0) target = $region17
    $region16: #{encoder_forward.7} parent=1 // pred_region
      _
    $region17: #{encoder_forward.7} parent=1 // pred_fallthru
      _
    // Predicated region
    $region18: #{encoder_forward.7} parent=1 // pred_check
      _
    $region19: #{encoder_forward.7} parent=1 // pred_check_branch
      %21 = sbr.rel (0) target = $region21
    $region20: #{encoder_forward.7} parent=1 // pred_region
      _
    $region21: #{encoder_forward.7} parent=1 // pred_fallthru
      _
    // Predicated region
    $region22: #{encoder_forward.7} parent=1 // pred_check
      _
    $region23: #{encoder_forward.7} parent=1 // pred_check_branch
      %23 = sbr.rel (0) target = $region25
    $region24: #{encoder_forward.7} parent=1 // pred_region
      _
    $region25: #{encoder_forward.7} parent=1 // pred_fallthru
      _
    %v25 = vld [vmem:[%s0] sm:$0xff]
    %v26 = vld [vmem:[%s0 + $0x8] sm:$0xf]
    %v27 = vld [vmem:[%s0 + $0xc] sm:$0xff]
    %v28 = vld [vmem:[%s0 + $0x14] sm:$0xf]
    %v29 = vld [vmem:[%s0 + $0x18] sm:$0xff]
    %v30 = vld [vmem:[%s0 + $0x20] sm:$0xf]
    %v31 = vld [vmem:[%s0 + $0x24] sm:$0xff]
    %v32 = vld [vmem:[%s0 + $0x2c] sm:$0xf]
    %v33 = vld [vmem:[%s1] sm:$0xf]
    %v34 = vld [vmem:[%s1 + $0x4] sm:$0xf]
    %v35 = vld [vmem:[%s1 + $0x8] sm:$0xf]
    %v36 = vld [vmem:[%s1 + $0xc] sm:$0xf]
    %v37 = vld [vmem:[%s1 + $0x10] sm:$0xf]
    %v38 = vld [vmem:[%s1 + $0x14] sm:$0xf]
    %v39 = vld [vmem:[%s1 + $0x18] sm:$0xf]
    %v40 = vld [vmem:[%s1 + $0x1c] sm:$0xf]
    %v41 = vld [vmem:[%s1 + $0x20] sm:$0xf]
    %v42 = vld [vmem:[%s1 + $0x24] sm:$0xf]
    %v43 = vld [vmem:[%s1 + $0x28] sm:$0xf]
    %v44 = vld [vmem:[%s1 + $0x2c] sm:$0xf]
    %v45 = vld [vmem:[%s1 + $0x30] sm:$0xf]
    %v46 = vld [vmem:[%s1 + $0x34] sm:$0xf]
    %v47 = vld [vmem:[%s1 + $0x38] sm:$0xf]
    %v48 = vld [vmem:[%s1 + $0x3c] sm:$0xf]
    %v49 = vld [vmem:[%s1 + $0x40] sm:$0xf]
    %v50 = vld [vmem:[%s1 + $0x44] sm:$0xf]
    %v51 = vld [vmem:[%s1 + $0x48] sm:$0xf]
    %v52 = vld [vmem:[%s1 + $0x4c] sm:$0xf]
    %v53 = vld [vmem:[%s1 + $0x50] sm:$0xf]
    %v54 = vld [vmem:[%s1 + $0x54] sm:$0xf]
    %v55 = vld [vmem:[%s1 + $0x58] sm:$0xf]
    %v56 = vld [vmem:[%s1 + $0x5c] sm:$0xf]
    %v57 = vld [vmem:[%s1 + $0x60] sm:$0xf]
    %v58 = vld [vmem:[%s1 + $0x64] sm:$0xf]
    %v59 = vld [vmem:[%s1 + $0x68] sm:$0xf]
    %v60 = vld [vmem:[%s1 + $0x6c] sm:$0xf]
    %v61 = vld [vmem:[%s1 + $0x70] sm:$0xf]
    %v62 = vld [vmem:[%s1 + $0x74] sm:$0xf]
    %v63 = vld [vmem:[%s1 + $0x78] sm:$0xf]
    %v64 = vld [vmem:[%s1 + $0x7c] sm:$0xf]
    %v65 = vld [vmem:[%s1 + $0x80] sm:$0xf]
    %v66 = vld [vmem:[%s1 + $0x84] sm:$0xf]
    %v67 = vld [vmem:[%s1 + $0x88] sm:$0xf]
    %v68 = vld [vmem:[%s1 + $0x8c] sm:$0xf]
    %v77 = vunpack.c.l.b16 %v25
    %v78 = vunpack.c.h.b16 %v25
    %v79 = vunpack.c.l.b16 %v26
    %v80 = vunpack.c.l.b16 %v27
    %v81 = vunpack.c.h.b16 %v27
    %v82 = vunpack.c.l.b16 %v28
    %v83 = vunpack.c.l.b16 %v29
    %v84 = vunpack.c.h.b16 %v29
    %v85 = vunpack.c.l.b16 %v30
    %v86 = vunpack.c.l.b16 %v31
    %v87 = vunpack.c.h.b16 %v31
    %v88 = vunpack.c.l.b16 %v32
    %v89 = vpack.c.b16 %v80, %v77
    %v90 = vpack.c.b16 %v81, %v78
    %v91 = vpack.c.b16 %v82, %v79
    %v92 = vpack.c.b16 %v86, %v83
    %v93 = vpack.c.b16 %v87, %v84
    %v94 = vpack.c.b16 %v88, %v85
    %v135 = vunpack.c.l.b16 %v33
    %v136 = vunpack.c.l.b16 %v34
    %v137 = vunpack.c.l.b16 %v35
    %v138 = vunpack.c.l.b16 %v36
    %v139 = vunpack.c.l.b16 %v37
    %v140 = vunpack.c.l.b16 %v38
    %v141 = vunpack.c.l.b16 %v39
    %v142 = vunpack.c.l.b16 %v40
    %v143 = vunpack.c.l.b16 %v41
    %v144 = vunpack.c.l.b16 %v42
    %v145 = vunpack.c.l.b16 %v43
    %v146 = vunpack.c.l.b16 %v44
    %v147 = vunpack.c.l.b16 %v45
    %v148 = vunpack.c.l.b16 %v46
    %v149 = vunpack.c.l.b16 %v47
    %v150 = vunpack.c.l.b16 %v48
    %v151 = vunpack.c.l.b16 %v49
    %v152 = vunpack.c.l.b16 %v50
    %v153 = vunpack.c.l.b16 %v51
    %v154 = vunpack.c.l.b16 %v52
    %v155 = vunpack.c.l.b16 %v53
    %v156 = vunpack.c.l.b16 %v54
    %v157 = vunpack.c.l.b16 %v55
    %v158 = vunpack.c.l.b16 %v56
    %v159 = vunpack.c.l.b16 %v57
    %v160 = vunpack.c.l.b16 %v58
    %v161 = vunpack.c.l.b16 %v59
    %v162 = vunpack.c.l.b16 %v60
    %v163 = vunpack.c.l.b16 %v61
    %v164 = vunpack.c.l.b16 %v62
    %v165 = vunpack.c.l.b16 %v63
    %v166 = vunpack.c.l.b16 %v64
    %v167 = vunpack.c.l.b16 %v65
    %v168 = vunpack.c.l.b16 %v66
    %v169 = vunpack.c.l.b16 %v67
    %v170 = vunpack.c.l.b16 %v68
    %v171 = vpack.c.b16 %v136, %v135
    %v172 = vpack.c.b16 %v138, %v137
    %v173 = vpack.c.b16 %v140, %v139
    %v174 = vpack.c.b16 %v142, %v141
    %v175 = vpack.c.b16 %v144, %v143
    %v176 = vpack.c.b16 %v146, %v145
    %v177 = vpack.c.b16 %v148, %v147
    %v178 = vpack.c.b16 %v150, %v149
    %v179 = vpack.c.b16 %v152, %v151
    %v180 = vpack.c.b16 %v154, %v153
    %v181 = vpack.c.b16 %v156, %v155
    %v182 = vpack.c.b16 %v158, %v157
    %v183 = vpack.c.b16 %v160, %v159
    %v184 = vpack.c.b16 %v162, %v161
    %v185 = vpack.c.b16 %v164, %v163
    %v186 = vpack.c.b16 %v166, %v165
    %v187 = vpack.c.b16 %v168, %v167
    %v188 = vpack.c.b16 %v170, %v169
    %vm207 = vcmask 261120
    %v209 = vsel %vm207, %v91, 0
    %v212 = vsel %vm207, %v94, 0
    %214 = vmatprep.subr.bf16.mxu0 0
    %215 = vmatpush1.bf16.msra.mxu0 %v171
    %216 = vmatprep.subr.bf16.mxu0 0
    %217 = vmatpush1.bf16.msra.mxu0 %v172
    %218 = vmatprep.subr.bf16.mxu0 0
    %219 = vmatpush1.bf16.msra.mxu0 %v173
    %220 = vmatprep.subr.bf16.mxu0 0
    %221 = vmatpush1.bf16.msra.mxu0 %v174
    %222 = vmatprep.subr.bf16.mxu0 0
    %223 = vmatpush1.bf16.msra.mxu0 %v175
    %224 = vmatprep.subr.bf16.mxu0 0
    %225 = vmatpush1.bf16.msra.mxu0 %v176
    %226 = vmatprep.subr.bf16.mxu0 0
    %227 = vmatpush1.bf16.msra.mxu0 %v177
    %228 = vmatprep.subr.bf16.mxu0 0
    %229 = vmatpush1.bf16.msra.mxu0 %v178
    %230 = vmatprep.subr.bf16.mxu0 0
    %231 = vmatpush1.bf16.msra.mxu0 %v179
    %232 = vmatprep.subr.bf16.mxu0 0
    %233 = vmatpush1.bf16.msra.mxu0 %v180
    %234 = vmatprep.subr.bf16.mxu0 0
    %235 = vmatpush1.bf16.msra.mxu0 %v181
    %236 = vmatprep.subr.bf16.mxu0 0
    %237 = vmatpush1.bf16.msra.mxu0 %v182
    %238 = vmatprep.subr.bf16.mxu0 0
    %239 = vmatpush1.bf16.msra.mxu0 %v183
    %240 = vmatprep.subr.bf16.mxu0 0
    %241 = vmatpush1.bf16.msra.mxu0 %v184
    %242 = vmatprep.subr.bf16.mxu0 0
    %243 = vmatpush1.bf16.msra.mxu0 %v185
    %244 = vmatprep.subr.bf16.mxu0 0
    %245 = vmatpush1.bf16.msra.mxu0 %v186
    %246 = vmatprep.mubr.bf16.mxu0 %v90
    %247 = vmatmul.mubr.bf16.gmra.mrb[0].mxu0 %v89
    %v248 = vpop.f32.mrb[0].mxu0
    %v249 = vadd.f32 0.0, %v248
    %v250 = vpop.f32.mrb[0].mxu0
    %v251 = vpop.f32.mrb[0].mxu0
    %v252 = vadd.f32 0.0, %v251
    %v253 = vpop.f32.mrb[0].mxu0
    %254 = vmatprep.mubr.bf16.mxu0 %v93
    %255 = vmatmul.mubr.bf16.gmra.mrb[0].mxu0 %v92
    %v256 = vpop.f32.mrb[0].mxu0
    %v257 = vadd.f32 0.0, %v256
    %v258 = vpop.f32.mrb[0].mxu0
    %v259 = vpop.f32.mrb[0].mxu0
    %v260 = vadd.f32 0.0, %v259
    %v261 = vpop.f32.mrb[0].mxu0
    %262 = vdwg.mxu0
    %263 = vmatprep.subr.bf16.mxu0 0
    %264 = vmatpush1.bf16.msra.mxu0 %v187
    %265 = vmatprep.subr.bf16.mxu0 0
    %266 = vmatpush1.bf16.msra.mxu0 %v188
    %267 = vmatprep.subr.bf16.mxu0 0
    %268 = vmatpush1.bf16.msra.mxu0 0
    %269 = vmatprep.subr.bf16.mxu0 0
    %270 = vmatpush1.bf16.msra.mxu0 0
    %271 = vmatprep.subr.bf16.mxu0 0
    %272 = vmatpush1.bf16.msra.mxu0 0
    %273 = vmatprep.subr.bf16.mxu0 0
    %274 = vmatpush1.bf16.msra.mxu0 0
    %275 = vmatprep.subr.bf16.mxu0 0
    %276 = vmatpush1.bf16.msra.mxu0 0
    %277 = vmatprep.subr.bf16.mxu0 0
    %278 = vmatpush1.bf16.msra.mxu0 0
    %279 = vmatprep.subr.bf16.mxu0 0
    %280 = vmatpush1.bf16.msra.mxu0 0
    %281 = vmatprep.subr.bf16.mxu0 0
    %282 = vmatpush1.bf16.msra.mxu0 0
    %283 = vmatprep.subr.bf16.mxu0 0
    %284 = vmatpush1.bf16.msra.mxu0 0
    %285 = vmatprep.subr.bf16.mxu0 0
    %286 = vmatpush1.bf16.msra.mxu0 0
    %287 = vmatprep.subr.bf16.mxu0 0
    %288 = vmatpush1.bf16.msra.mxu0 0
    %289 = vmatprep.subr.bf16.mxu0 0
    %290 = vmatpush1.bf16.msra.mxu0 0
    %291 = vmatprep.subr.bf16.mxu0 0
    %292 = vmatpush1.bf16.msra.mxu0 0
    %293 = vmatprep.subr.bf16.mxu0 0
    %294 = vmatpush1.bf16.msra.mxu0 0
    %295 = vmatprep.mubr.bf16.mxu0 0
    %296 = vmatmul.mubr.bf16.gmra.mrb[0].mxu0 %v209
    %v297 = vpop.f32.mrb[0].mxu0
    %v298 = vadd.f32 %v249, %v297
    %v299 = vpop.f32.mrb[0].mxu0
    %v300 = vpop.f32.mrb[0].mxu0
    %v301 = vadd.f32 %v252, %v300
    %v302 = vpop.f32.mrb[0].mxu0
    %303 = vmatprep.mubr.bf16.mxu0 0
    %304 = vmatmul.mubr.bf16.gmra.mrb[0].mxu0 %v212
    %v305 = vpop.f32.mrb[0].mxu0
    %v306 = vadd.f32 %v257, %v305
    %v307 = vpop.f32.mrb[0].mxu0
    %v308 = vpop.f32.mrb[0].mxu0
    %v309 = vadd.f32 %v260, %v308
    %v310 = vpop.f32.mrb[0].mxu0
    %311 = vdwg.mxu0
    %v312 = vld [vmem:[%s2] sm:$0x3]
    %vm313 = vcmask 130048
    %v314 = vsel %vm313, %v298, 0.0
    %v315 = vsel %vm313, %v301, 0.0
    %v316 = vadd.f32 %v314, %v315
    %v317 = vsel %vm313, %v306, 0.0
    %v318 = vadd.f32 %v316, %v317
    %v319 = vsel %vm313, %v309, 0.0
    %v320 = vadd.f32 %v318, %v319
    %v321 = vrot.slane %v320, 4
    %v322 = vadd.f32 %v320, %v321
    %v323 = vrot.slane %v322, 2
    %v324 = vadd.f32 %v322, %v323
    %v325 = vrot.slane %v324, 1
    %v326 = vadd.f32 %v324, %v325
    %v327 = vmul.f32 %v326, 0.03125
    %v328 = vmul.f32 %v298, %v298
    %v329 = vmul.f32 %v301, %v301
    %v330 = vmul.f32 %v306, %v306
    %v331 = vmul.f32 %v309, %v309
    %v332 = vsel %vm313, %v328, 0.0
    %v333 = vsel %vm313, %v329, 0.0
    %v334 = vadd.f32 %v332, %v333
    %v335 = vsel %vm313, %v330, 0.0
    %v336 = vadd.f32 %v334, %v335
    %v337 = vsel %vm313, %v331, 0.0
    %v338 = vadd.f32 %v336, %v337
    %v339 = vrot.slane %v338, 4
    %v340 = vadd.f32 %v338, %v339
    %v341 = vrot.slane %v340, 2
    %v342 = vadd.f32 %v340, %v341
    %v343 = vrot.slane %v342, 1
    %v344 = vadd.f32 %v342, %v343
    %v345 = vmul.f32 %v344, 0.03125
    %v346 = vmul.f32 %v327, %v327
    %v347 = vsub.f32 %v345, %v346
    %v348 = vsub.f32 %v298, %v327
    %v349 = vsub.f32 %v301, %v327
    %v350 = vsub.f32 %v306, %v327
    %v351 = vsub.f32 %v309, %v327
    %v352 = vadd.f32 %v347, 1e-05
    %v353 = vrsqrt.pop %v352
    %v354 = vmul.f32 %v348, %v353
    %v355 = vmul.f32 %v349, %v353
    %v356 = vmul.f32 %v350, %v353
    %v357 = vmul.f32 %v351, %v353
    %v358 = vlaneseq
    %v359 = vshrl.u32 %v358, 7
    %v360 = vsub.s32 0, %v359
    %v361 = vrot.slane %v312, %v360
    %v362 = vmul.f32 %v354, %v361
    %v363 = vmul.f32 %v355, %v361
    %v364 = vmul.f32 %v356, %v361
    %v365 = vmul.f32 %v357, %v361
    %v366 = vlaneseq
    %v367 = vshrl.u32 %v366, 7
    %v368 = vsub.s32 1, %v367
    %v369 = vrot.slane %v312, %v368
    %v370 = vadd.f32 %v362, %v369
    %v371 = vadd.f32 %v363, %v369
    %v372 = vadd.f32 %v364, %v369
    %v373 = vadd.f32 %v365, %v369
    %v374 = vmax.f32 %v370, 0.0
    %v375 = vmax.f32 %v371, 0.0
    %v376 = vmax.f32 %v372, 0.0
    %v377 = vmax.f32 %v373, 0.0
    %v378 = vpack.c.bf16 %v375, %v374
    %v379 = vpack.c.bf16 %v377, %v376
    %v380 = vld [vmem:[%s3] sm:$0xf]
    %v381 = vld [vmem:[%s3 + $0x4] sm:$0xf]
    %v384 = vunpack.c.l.b16 %v380
    %v385 = vunpack.c.l.b16 %v381
    %v386 = vpack.c.b16 %v385, %v384
    %v389 = vsel %vm313, %v378, 0
    %v392 = vsel %vm313, %v379, 0
    %394 = vmatprep.subr.bf16.mxu0 0
    %395 = vmatpush1.bf16.msra.mxu0 %v386
    %396 = vmatprep.subr.bf16.mxu0 0
    %397 = vmatpush1.bf16.msra.mxu0 0
    %398 = vmatprep.subr.bf16.mxu0 0
    %399 = vmatpush1.bf16.msra.mxu0 0
    %400 = vmatprep.subr.bf16.mxu0 0
    %401 = vmatpush1.bf16.msra.mxu0 0
    %402 = vmatprep.subr.bf16.mxu0 0
    %403 = vmatpush1.bf16.msra.mxu0 0
    %404 = vmatprep.subr.bf16.mxu0 0
    %405 = vmatpush1.bf16.msra.mxu0 0
    %406 = vmatprep.subr.bf16.mxu0 0
    %407 = vmatpush1.bf16.msra.mxu0 0
    %408 = vmatprep.subr.bf16.mxu0 0
    %409 = vmatpush1.bf16.msra.mxu0 0
    %410 = vmatprep.subr.bf16.mxu0 0
    %411 = vmatpush1.bf16.msra.mxu0 0
    %412 = vmatprep.subr.bf16.mxu0 0
    %413 = vmatpush1.bf16.msra.mxu0 0
    %414 = vmatprep.subr.bf16.mxu0 0
    %415 = vmatpush1.bf16.msra.mxu0 0
    %416 = vmatprep.subr.bf16.mxu0 0
    %417 = vmatpush1.bf16.msra.mxu0 0
    %418 = vmatprep.subr.bf16.mxu0 0
    %419 = vmatpush1.bf16.msra.mxu0 0
    %420 = vmatprep.subr.bf16.mxu0 0
    %421 = vmatpush1.bf16.msra.mxu0 0
    %422 = vmatprep.subr.bf16.mxu0 0
    %423 = vmatpush1.bf16.msra.mxu0 0
    %424 = vmatprep.subr.bf16.mxu0 0
    %425 = vmatpush1.bf16.msra.mxu0 0
    %426 = vmatprep.mubr.bf16.mxu0 0
    %427 = vmatmul.mubr.bf16.gmra.mrb[0].mxu0 %v389
    %v428 = vpop.f32.mrb[0].mxu0
    %v429 = vadd.f32 0.0, %v428
    %v430 = vpop.f32.mrb[0].mxu0
    %v431 = vpop.f32.mrb[0].mxu0
    %v432 = vadd.f32 0.0, %v431
    %v433 = vpop.f32.mrb[0].mxu0
    %434 = vmatprep.mubr.bf16.mxu0 0
    %435 = vmatmul.mubr.bf16.gmra.mrb[0].mxu0 %v392
    %v436 = vpop.f32.mrb[0].mxu0
    %v437 = vadd.f32 0.0, %v436
    %v438 = vpop.f32.mrb[0].mxu0
    %v439 = vpop.f32.mrb[0].mxu0
    %v440 = vadd.f32 0.0, %v439
    %v441 = vpop.f32.mrb[0].mxu0
    %442 = vdwg.mxu0
    %v443 = vld [vmem:[%s4] sm:$0x3]
    %v444 = vsel %vm207, %v429, 0.0
    %v445 = vsel %vm207, %v432, 0.0
    %v446 = vadd.f32 %v444, %v445
    %v447 = vsel %vm207, %v437, 0.0
    %v448 = vadd.f32 %v446, %v447
    %v449 = vsel %vm207, %v440, 0.0
    %v450 = vadd.f32 %v448, %v449
    %v451 = vrot.slane %v450, 4
    %v452 = vadd.f32 %v450, %v451
    %v453 = vrot.slane %v452, 2
    %v454 = vadd.f32 %v452, %v453
    %v455 = vrot.slane %v454, 1
    %v456 = vadd.f32 %v454, %v455
    %v457 = vmul.f32 %v456, 0.03125
    %v458 = vmul.f32 %v429, %v429
    %v459 = vmul.f32 %v432, %v432
    %v460 = vmul.f32 %v437, %v437
    %v461 = vmul.f32 %v440, %v440
    %v462 = vsel %vm207, %v458, 0.0
    %v463 = vsel %vm207, %v459, 0.0
    %v464 = vadd.f32 %v462, %v463
    %v465 = vsel %vm207, %v460, 0.0
    %v466 = vadd.f32 %v464, %v465
    %v467 = vsel %vm207, %v461, 0.0
    %v468 = vadd.f32 %v466, %v467
    %v469 = vrot.slane %v468, 4
    %v470 = vadd.f32 %v468, %v469
    %v471 = vrot.slane %v470, 2
    %v472 = vadd.f32 %v470, %v471
    %v473 = vrot.slane %v472, 1
    %v474 = vadd.f32 %v472, %v473
    %v475 = vmul.f32 %v474, 0.03125
    %v476 = vmul.f32 %v457, %v457
    %v477 = vsub.f32 %v475, %v476
    %v478 = vsub.f32 %v429, %v457
    %v479 = vsub.f32 %v432, %v457
    %v480 = vsub.f32 %v437, %v457
    %v481 = vsub.f32 %v440, %v457
    %v482 = vadd.f32 %v477, 1e-05
    %v483 = vrsqrt.pop %v482
    %v484 = vmul.f32 %v478, %v483
    %v485 = vmul.f32 %v479, %v483
    %v486 = vmul.f32 %v480, %v483
    %v487 = vmul.f32 %v481, %v483
    %v488 = vlaneseq
    %v489 = vshrl.u32 %v488, 7
    %v490 = vsub.s32 0, %v489
    %v491 = vrot.slane %v443, %v490
    %v492 = vmul.f32 %v484, %v491
    %v493 = vmul.f32 %v485, %v491
    %v494 = vmul.f32 %v486, %v491
    %v495 = vmul.f32 %v487, %v491
    %v496 = vlaneseq
    %v497 = vshrl.u32 %v496, 7
    %v498 = vsub.s32 1, %v497
    %v499 = vrot.slane %v443, %v498
    %v500 = vadd.f32 %v492, %v499
    %v501 = vadd.f32 %v493, %v499
    %v502 = vadd.f32 %v494, %v499
    %v503 = vadd.f32 %v495, %v499
    %v504 = vld [vmem:[%s5] sm:$0xff]
    %v505 = vld [vmem:[%s5 + $0x8] sm:$0xff]
    %v506 = vld [vmem:[%s5 + $0x10] sm:$0xff]
    %v507 = vld [vmem:[%s5 + $0x18] sm:$0xff]
    %v508 = vadd.f32 %v500, %v504
    %v509 = vadd.f32 %v501, %v505
    %v510 = vadd.f32 %v502, %v506
    %v511 = vadd.f32 %v503, %v507
    %v512 = vmax.f32 %v508, 0.0
    %v513 = vmax.f32 %v509, 0.0
    %v514 = vmax.f32 %v510, 0.0
    %v515 = vmax.f32 %v511, 0.0
    %516 = vst.msk [vmem:[#allocation2] sm:$0xff] %vm207, %v512
    %517 = vst.msk [vmem:[#allocation2 + $0x8] sm:$0xff] %vm207, %v513
    %518 = vst.msk [vmem:[#allocation2 + $0x10] sm:$0xff] %vm207, %v514
    %519 = vst.msk [vmem:[#allocation2 + $0x18] sm:$0xff] %vm207, %v515
    // Predicated region
    $region26: #{encoder_forward.7} parent=1 // pred_check
      _
    $region27: #{encoder_forward.7} parent=1 // pred_check_branch
      %521 = sbr.rel (0) target = $region29
    $region28: #{encoder_forward.7} parent=1 // pred_region
      %s523 = ssub.s32 512, 512
      %524 = vsyncadd [#allocation3], %s523
      %s525 = sshll.u32 [#allocation2], 4
      %s526 = int_to_ptr.vmem [resolvable:$true] %s525
      %531 = dma.vmem_to_hbm [thread:$0]  %s526, 512, %s6, [#allocation3], 128, 128, 8
    $region29: #{encoder_forward.7} parent=1 // pred_fallthru
      _
    // Predicated region
    $region30: #{encoder_forward.7} parent=1 // pred_check
      _
    $region31: #{encoder_forward.7} parent=1 // pred_check_branch
      %533 = sbr.rel (0) target = $region33
    $region32: #{encoder_forward.7} parent=1 // pred_region
      %534 = dma.done [#allocation3], 512
    $region33: #{encoder_forward.7} parent=1 // pred_fallthru
      _
    %535 = vsyncpa [#allocation3], 1

</llo_original>
